<compile_context>
chip_gen: v6e
topology: v6e:2x2x1
jax: 0.10.0
libtpu: 0.0.40
codegen_flags: <defaults>
</compile_context>

<pallas_src>
import functools

import jax
import jax.numpy as jnp
from jax.experimental import pallas as pl
from jax.experimental.pallas import tpu as pltpu

K_MIX = 3                       # 3-component logistic mixture
_VMEM_LIMIT = 32 * 1024 * 1024  # working set is tiny; safe on v5e/v6e/v7x (64 MiB)


# ----------------------------------------------------------------------------
# helpers
# ----------------------------------------------------------------------------
def _round_up(x, m):
    return (x + m - 1) // m * m


def _cdiv(a, b):
    return (a + b - 1) // b


def _type_a_taps(k=7):
    """Non-zero taps of the MConv7x7 type-A mask (rows above + left of center)."""
    c = k // 2
    return [(i, j) for i in range(k) for j in range(k) if i < c or (i == c and j < c)]


def _tap_weight(w, taps):
    """(Cout, Cin, kh, kw) -> (Cout, len(taps)*Cin), tap-major (matches kernel concat)."""
    cols = [w[:, :, i, j] for (i, j) in taps]
    return jnp.stack(cols, axis=1).reshape(w.shape[0], len(taps) * w.shape[1])


# ----------------------------------------------------------------------------
# fused Pallas kernel
# ----------------------------------------------------------------------------
def _hdb_fused_kernel(msb_ref, lsb_ref, mask_ref,
                      ws1_ref, bs1_ref, ws2_ref, bs2_ref, wm_ref, bm_ref,
                      w1_ref, b1_ref, w2_ref, b2_ref, w3_ref, b3_ref,
                      out_ref, *, cin, cmid, k_mix, thw, halo, off, win, d3, d7):
    f32, bf16 = jnp.float32, jnp.bfloat16
    kc = k_mix * cin
    t_ext = thw + 2 * halo                      # cs1 is needed on a +/- halo window

    # One aligned dynamic window load per resident input; all tap shifts are
    # static slices of these VMEM values (no unaligned dynamic ref slices).
    wbase = pl.multiple_of(pl.program_id(1) * thw, 128)
    msb_win = msb_ref[0, :, pl.ds(wbase, win)]            # (cin, win)  bf16
    lsb_win = lsb_ref[0, :, pl.ds(wbase, win)]            # (cin, win)  f32
    mask_win = mask_ref[:, pl.ds(wbase, win)]             # (1,   win)  f32

    def mm(w_r, v):
        return jnp.dot(w_r[...], v, preferred_element_type=f32)

    # ---- Structural_Context_Extractor conv #1 (3x3 + ReLU), halo-extended ---
    e0 = off - halo                                       # ext-window start (window-rel)
    p1 = jnp.concatenate([msb_win[:, e0 + d:e0 + d + t_ext] for d in d3], axis=0)
    cs1 = jnp.maximum(mm(ws1_ref, p1) + bs1_ref[...], 0.0)          # (cmid, t_ext) f32
    m_ext = mask_win[:, e0:e0 + t_ext]                              # (1, t_ext)
    # zero outside the true image: enforces conv#2's zero padding and kills
    # any flat-stride row-wrap garbage before it can propagate.
    cs1 = (cs1 * m_ext).astype(bf16)

    # ---- Structural_Context_Extractor conv #2 (3x3), central thw columns ----
    p2 = jnp.concatenate([cs1[:, halo + d:halo + d + thw] for d in d3], axis=0)
    cs = mm(ws2_ref, p2) + bs2_ref[...]                             # (cmid, thw)

    # ---- MConv7x7, type-A mask applied structurally (24 taps only) ----------
    pm = jnp.concatenate([lsb_win[:, off + d:off + d + thw] for d in d7],
                         axis=0).astype(bf16)
    cl = mm(wm_ref, pm) + bm_ref[...]                               # (cmid, thw)

    # ---- Parameter_Predictor: 1x1 chain, concat + stacked head weights ------
    h0 = jnp.concatenate([cl, cs], axis=0).astype(bf16)             # (2*cmid, thw)
    h1 = jnp.maximum(mm(w1_ref, h0) + b1_ref[...], 0.0)
    h2 = jnp.maximum(mm(w2_ref, h1.astype(bf16)) + b2_ref[...], 0.0)
    p3 = mm(w3_ref, h2.astype(bf16)) + b3_ref[...]                  # (3*kc, thw)
    logits, mu, raw_s = p3[:kc], p3[kc:2 * kc], p3[2 * kc:]

    # ---- logistic mixture likelihood (Distribution_for_entropy2) ------------
    x = lsb_win[:, off:off + thw]                                   # (cin, thw) labels
    inv_s = 1.0 / jnp.maximum(jnp.abs(raw_s), 1e-6)                 # exact divide
    xk = x if cin == 1 else jnp.concatenate([x] * k_mix, axis=0)    # broadcast / (kc,thw)
    args = jnp.concatenate([(xk + 0.5 - mu) * inv_s,
                            (xk - 0.5 - mu) * inv_s], axis=0)       # (2*kc, thw)
    sg = jax.nn.sigmoid(args)                                       # one batched EUP call
    cdf = sg[:kc] - sg[kc:]                                         # (kc, thw)

    # softmax over mixture components, vectorised over channels (no 1-row slices)
    lg = [logits[k * cin:(k + 1) * cin] for k in range(k_mix)]
    cd = [cdf[k * cin:(k + 1) * cin] for k in range(k_mix)]
    mx = lg[0]
    for l_ in lg[1:]:
        mx = jnp.maximum(mx, l_)
    es = [jnp.exp(l_ - mx) for l_ in lg]
    den = es[0]
    num = es[0] * cd[0]
    for e_, c_ in zip(es[1:], cd[1:]):
        den = den + e_
        num = num + e_ * c_
    prob = jnp.maximum(num / den, 1e-6)                             # Low_bound (exact div)
    bits_c = jnp.sum(-jnp.log2(prob), axis=0, keepdims=True)        # (1, thw) sum over cin

    # ---- mask padded frame columns, emit per-tile partial bit sum -----------
    m_c = mask_win[:, off:off + thw]
    total = jnp.sum(bits_c * m_c, axis=1, keepdims=True)            # (1, 1)
    out_ref[...] = jnp.broadcast_to(total, out_ref.shape)           # lane-dense (1,1,1,128)


# ----------------------------------------------------------------------------
# HDB forward
# ----------------------------------------------------------------------------
def hdb_forward(params, msb, lsb):
    B, cin, H, W = lsb.shape
    cmid = params["s_b1"].shape[0]
    kc = K_MIX * cin

    # Common pad-3 frame for both inputs and all intermediates; flat fat-stride
    # layout makes every conv tap a constant flat offset.
    Hf, Wf = H + 6, W + 6
    Lf = Hf * Wf
    halo = Wf + 1                                    # conv#2 needs cs1 on +/- (Wf+1)
    thw = min(2048, _round_up(Lf, 128))              # large lane tiles (review)
    n_t = _cdiv(Lf, thw)
    off = _round_up(3 * Wf + 3, 128)                 # aligned left guard >= deepest reach
    win = off + thw + _round_up(2 * Wf + 2, 128)     # per-tile resident window length
    total_len = (n_t - 1) * thw + win
    # TODO(synk): for very large frames (total_len*cin f32 approaching VMEM),
    # also band the resident msb/lsb blocks instead of keeping the whole frame.

    def embed(x4):
        xf = jnp.pad(x4, ((0, 0), (0, 0), (3, 3), (3, 3))).reshape(B, x4.shape[1], Lf)
        return jnp.pad(xf, ((0, 0), (0, 0), (off, total_len - off - Lf)))

    msb_flat = embed(msb.astype(jnp.float32)).astype(jnp.bfloat16)   # conv-only input
    lsb_flat = embed(lsb.astype(jnp.float32))                        # f32 (also the label)

    mask2d = jnp.pad(jnp.ones((H, W), jnp.float32), ((3, 3), (3, 3))).reshape(1, Lf)
    mask_flat = jnp.pad(mask2d, ((0, 0), (off, total_len - off - Lf)))

    taps3 = [(i, j) for i in range(3) for j in range(3)]
    taps7 = _type_a_taps(7)
    d3 = tuple((i - 1) * Wf + (j - 1) for (i, j) in taps3)
    d7 = tuple((i - 3) * Wf + (j - 3) for (i, j) in taps7)

    f32, bf16 = jnp.float32, jnp.bfloat16
    weights = [
        _tap_weight(params["s_w1"], taps3).astype(bf16),
        params["s_b1"].reshape(cmid, 1).astype(f32),
        _tap_weight(params["s_w2"], taps3).astype(bf16),
        params["s_b2"].reshape(cmid, 1).astype(f32),
        # type-A mask applied structurally (tap subset); multiply kept for fidelity.
        _tap_weight(params["m_w"] * params["m_mask"], taps7).astype(bf16),
        params["m_b"].reshape(cmid, 1).astype(f32),
        params["p_w1"][:, :, 0, 0].astype(bf16),          # full (cmid, 2*cmid): [cl | cs]
        params["p_b1"].reshape(cmid, 1).astype(f32),
        params["p_w2"][:, :, 0, 0].astype(bf16),
        params["p_b2"].reshape(cmid, 1).astype(f32),
        params["p_w3"][:, :, 0, 0].astype(bf16),          # stacked (3*kc, cmid)
        params["p_b3"].reshape(3 * kc, 1).astype(f32),
    ]

    in_specs = ([pl.BlockSpec((1, cin, total_len), lambda b, t: (b, 0, 0)),
                 pl.BlockSpec((1, cin, total_len), lambda b, t: (b, 0, 0)),
                 pl.BlockSpec((1, total_len), lambda b, t: (0, 0))]
                + [pl.BlockSpec(a.shape, lambda b, t: (0, 0)) for a in weights])

    out = pl.pallas_call(
        functools.partial(_hdb_fused_kernel, cin=cin, cmid=cmid, k_mix=K_MIX,
                          thw=thw, halo=halo, off=off, win=win, d3=d3, d7=d7),
        out_shape=jax.ShapeDtypeStruct((B, n_t, 1, 128), jnp.float32),
        grid=(B, n_t),
        in_specs=in_specs,
        out_specs=pl.BlockSpec((1, 1, 1, 128), lambda b, t: (b, t, 0, 0)),
        compiler_params=pltpu.CompilerParams(
            dimension_semantics=("parallel", "parallel"),   # both axes core-shardable
            vmem_limit_bytes=_VMEM_LIMIT),
    )(msb_flat, lsb_flat, mask_flat, *weights)

    # per-tile partial bit sums -> per-sample bits (tiny XLA reduction)
    return jnp.sum(out[:, :, 0, 0], axis=1)


# ----------------------------------------------------------------------------
# Deterministic parameter construction
# ----------------------------------------------------------------------------
def _conv_init(key, cout, cin_, kh, kw):
    fan_in = cin_ * kh * kw
    w = jax.random.normal(key, (cout, cin_, kh, kw), jnp.float32)
    w = w * (1.0 / jnp.sqrt(float(fan_in)))
    b = jnp.zeros((cout,), jnp.float32)
    return w, b


def make_hdb_params(key, in_channels, out_channels):
    keys = jax.random.split(key, 6)
    p = {}
    p["s_w1"], p["s_b1"] = _conv_init(keys[0], out_channels, in_channels, 3, 3)
    p["s_w2"], p["s_b2"] = _conv_init(keys[1], out_channels, out_channels, 3, 3)

    p["m_w"], p["m_b"] = _conv_init(keys[2], out_channels, in_channels, 7, 7)
    mask = jnp.ones((7, 7), jnp.float32)
    mask = mask.at[3, 3:].set(0.0)    # type-A mask: center + right of center zeroed
    mask = mask.at[4:, :].set(0.0)    # rows below zeroed
    p["m_mask"] = mask[None, None]

    p["p_w1"], p["p_b1"] = _conv_init(keys[3], out_channels, 2 * out_channels, 1, 1)
    p["p_w2"], p["p_b2"] = _conv_init(keys[4], out_channels, out_channels, 1, 1)
    n_param_ch = 3 * K_MIX * in_channels
    p["p_w3"], p["p_b3"] = _conv_init(keys[5], n_param_ch, out_channels, 1, 1)
    # bias the scale group (last K_MIX*C channels) to ~1 so likelihoods are sane
    p["p_b3"] = p["p_b3"].at[2 * K_MIX * in_channels:].set(1.0)
    return p


if __name__ == "__main__":
    key = jax.random.PRNGKey(0)
    in_channels, out_channels = 1, 8
    B, H, W = 2, 16, 16

    k_params, k_msb, k_lsb = jax.random.split(key, 3)
    params = make_hdb_params(k_params, in_channels, out_channels)

    msb = jax.random.normal(k_msb, (B, in_channels, H, W), jnp.float32)
    lsb = jnp.round(2.0 * jax.random.normal(k_lsb, (B, in_channels, H, W), jnp.float32))

    bits = jax.jit(hdb_forward)(params, msb, lsb)
    jax.block_until_ready(bits)
    assert bits.shape == (B,) and bool(jnp.all(jnp.isfinite(bits)))
    print("KERNEL_OK")
</pallas_src>

<mosaic_0001>
module attributes {stable_mosaic.version = 11 : i64} {
  func.func @_hdb_fused_kernel(%arg0: i32, %arg1: i32, %arg2: memref<1x1x768xbf16, #tpu.memory_space<vmem>>, %arg3: memref<1x1x768xf32, #tpu.memory_space<vmem>>, %arg4: memref<1x768xf32, #tpu.memory_space<vmem>>, %arg5: memref<8x9xbf16, #tpu.memory_space<vmem>>, %arg6: memref<8x1xf32, #tpu.memory_space<vmem>>, %arg7: memref<8x72xbf16, #tpu.memory_space<vmem>>, %arg8: memref<8x1xf32, #tpu.memory_space<vmem>>, %arg9: memref<8x24xbf16, #tpu.memory_space<vmem>>, %arg10: memref<8x1xf32, #tpu.memory_space<vmem>>, %arg11: memref<8x16xbf16, #tpu.memory_space<vmem>>, %arg12: memref<8x1xf32, #tpu.memory_space<vmem>>, %arg13: memref<8x8xbf16, #tpu.memory_space<vmem>>, %arg14: memref<8x1xf32, #tpu.memory_space<vmem>>, %arg15: memref<9x8xbf16, #tpu.memory_space<vmem>>, %arg16: memref<9x1xf32, #tpu.memory_space<vmem>>, %arg17: memref<1x1x1x128xf32, #tpu.memory_space<vmem>>) attributes {dimension_semantics = [#tpu.dimension_semantics<parallel>, #tpu.dimension_semantics<parallel>], iteration_bounds = array<i64: 2, 1>, scalar_prefetch = 0 : i64, scratch_operands = 0 : i64, tpu.core_type = #tpu.core_type<tc>, window_params = [{transform_indices = @transform_0, window_bounds = array<i64: 1, 1, 768>}, {transform_indices = @transform_1, window_bounds = array<i64: 1, 1, 768>}, {pipeline_mode = #tpu.pipeline_mode<synchronous>, transform_indices = @transform_2, window_bounds = array<i64: 1, 768>}, {pipeline_mode = #tpu.pipeline_mode<synchronous>, transform_indices = @transform_3, window_bounds = array<i64: 8, 9>}, {pipeline_mode = #tpu.pipeline_mode<synchronous>, transform_indices = @transform_4, window_bounds = array<i64: 8, 1>}, {pipeline_mode = #tpu.pipeline_mode<synchronous>, transform_indices = @transform_5, window_bounds = array<i64: 8, 72>}, {pipeline_mode = #tpu.pipeline_mode<synchronous>, transform_indices = @transform_6, window_bounds = array<i64: 8, 1>}, {pipeline_mode = #tpu.pipeline_mode<synchronous>, transform_indices = @transform_7, window_bounds = array<i64: 8, 24>}, {pipeline_mode = #tpu.pipeline_mode<synchronous>, transform_indices = @transform_8, window_bounds = array<i64: 8, 1>}, {pipeline_mode = #tpu.pipeline_mode<synchronous>, transform_indices = @transform_9, window_bounds = array<i64: 8, 16>}, {pipeline_mode = #tpu.pipeline_mode<synchronous>, transform_indices = @transform_10, window_bounds = array<i64: 8, 1>}, {pipeline_mode = #tpu.pipeline_mode<synchronous>, transform_indices = @transform_11, window_bounds = array<i64: 8, 8>}, {pipeline_mode = #tpu.pipeline_mode<synchronous>, transform_indices = @transform_12, window_bounds = array<i64: 8, 1>}, {pipeline_mode = #tpu.pipeline_mode<synchronous>, transform_indices = @transform_13, window_bounds = array<i64: 9, 8>}, {pipeline_mode = #tpu.pipeline_mode<synchronous>, transform_indices = @transform_14, window_bounds = array<i64: 9, 1>}, {transform_indices = @transform_15, window_bounds = array<i64: 1, 1, 1, 128>}]} {
    %c512_i32 = arith.constant 512 : i32
    %0 = arith.muli %arg1, %c512_i32 : i32
    %1 = tpu.assume_multiple %0, 128 : i32
    %c0 = arith.constant 0 : index
    %c0_0 = arith.constant 0 : index
    %2 = arith.index_cast %1 : i32 to index
    %3 = vector.load %arg2[%c0, %c0_0, %2] : memref<1x1x768xbf16, #tpu.memory_space<vmem>>, vector<1x1x768xbf16>
    %4 = vector.shape_cast %3 : vector<1x1x768xbf16> to vector<1x768xbf16>
    %c0_1 = arith.constant 0 : index
    %c0_2 = arith.constant 0 : index
    %5 = arith.index_cast %1 : i32 to index
    %6 = vector.load %arg3[%c0_1, %c0_2, %5] : memref<1x1x768xf32, #tpu.memory_space<vmem>>, vector<1x1x768xf32>
    %7 = vector.shape_cast %6 : vector<1x1x768xf32> to vector<1x768xf32>
    %c0_3 = arith.constant 0 : index
    %8 = arith.index_cast %1 : i32 to index
    %9 = vector.load %arg4[%c0_3, %8] : memref<1x768xf32, #tpu.memory_space<vmem>>, vector<1x768xf32>
    %10 = vector.extract_strided_slice %4 {offsets = [0, 82], sizes = [1, 558], strides = [1, 1]} : vector<1x768xbf16> to vector<1x558xbf16>
    %11 = vector.extract_strided_slice %4 {offsets = [0, 83], sizes = [1, 558], strides = [1, 1]} : vector<1x768xbf16> to vector<1x558xbf16>
    %12 = vector.extract_strided_slice %4 {offsets = [0, 84], sizes = [1, 558], strides = [1, 1]} : vector<1x768xbf16> to vector<1x558xbf16>
    %13 = vector.extract_strided_slice %4 {offsets = [0, 104], sizes = [1, 558], strides = [1, 1]} : vector<1x768xbf16> to vector<1x558xbf16>
    %14 = vector.extract_strided_slice %4 {offsets = [0, 105], sizes = [1, 558], strides = [1, 1]} : vector<1x768xbf16> to vector<1x558xbf16>
    %15 = vector.extract_strided_slice %4 {offsets = [0, 106], sizes = [1, 558], strides = [1, 1]} : vector<1x768xbf16> to vector<1x558xbf16>
    %16 = vector.extract_strided_slice %4 {offsets = [0, 126], sizes = [1, 558], strides = [1, 1]} : vector<1x768xbf16> to vector<1x558xbf16>
    %17 = vector.extract_strided_slice %4 {offsets = [0, 127], sizes = [1, 558], strides = [1, 1]} : vector<1x768xbf16> to vector<1x558xbf16>
    %18 = vector.extract_strided_slice %4 {offsets = [0, 128], sizes = [1, 558], strides = [1, 1]} : vector<1x768xbf16> to vector<1x558xbf16>
    %19 = tpu.concatenate %10, %11, %12, %13, %14, %15, %16, %17, %18 in 0 : vector<1x558xbf16>, vector<1x558xbf16>, vector<1x558xbf16>, vector<1x558xbf16>, vector<1x558xbf16>, vector<1x558xbf16>, vector<1x558xbf16>, vector<1x558xbf16>, vector<1x558xbf16> -> vector<9x558xbf16>
    %c0_4 = arith.constant 0 : index
    %c0_5 = arith.constant 0 : index
    %20 = vector.load %arg5[%c0_4, %c0_5] : memref<8x9xbf16, #tpu.memory_space<vmem>>, vector<8x9xbf16>
    %cst = arith.constant dense<0.000000e+00> : vector<8x558xf32>
    %21 = tpu.matmul %20, %19, %cst {dimension_numbers = #tpu.dot_dimension_numbers<[1], [0], [0], [1], [0, 0, 1, 1], [], []>} : vector<8x9xbf16>, vector<9x558xbf16>, vector<8x558xf32> -> vector<8x558xf32>
    %c0_6 = arith.constant 0 : index
    %c0_7 = arith.constant 0 : index
    %22 = vector.load %arg6[%c0_6, %c0_7] : memref<8x1xf32, #tpu.memory_space<vmem>>, vector<8x1xf32>
    %23 = vector.broadcast %22 : vector<8x1xf32> to vector<8x558xf32>
    %24 = arith.addf %21, %23 : vector<8x558xf32>
    %cst_8 = arith.constant 0.000000e+00 : f32
    %25 = vector.broadcast %cst_8 : f32 to vector<8x558xf32>
    %26 = arith.maximumf %24, %25 : vector<8x558xf32>
    %27 = vector.extract_strided_slice %9 {offsets = [0, 105], sizes = [1, 558], strides = [1, 1]} : vector<1x768xf32> to vector<1x558xf32>
    %28 = vector.broadcast %27 : vector<1x558xf32> to vector<8x558xf32>
    %29 = arith.mulf %26, %28 : vector<8x558xf32>
    %30 = arith.truncf %29 : vector<8x558xf32> to vector<8x558xbf16>
    %31 = vector.extract_strided_slice %30 {offsets = [0, 0], sizes = [8, 512], strides = [1, 1]} : vector<8x558xbf16> to vector<8x512xbf16>
    %32 = vector.extract_strided_slice %30 {offsets = [0, 1], sizes = [8, 512], strides = [1, 1]} : vector<8x558xbf16> to vector<8x512xbf16>
    %33 = vector.extract_strided_slice %30 {offsets = [0, 2], sizes = [8, 512], strides = [1, 1]} : vector<8x558xbf16> to vector<8x512xbf16>
    %34 = vector.extract_strided_slice %30 {offsets = [0, 22], sizes = [8, 512], strides = [1, 1]} : vector<8x558xbf16> to vector<8x512xbf16>
    %35 = vector.extract_strided_slice %30 {offsets = [0, 23], sizes = [8, 512], strides = [1, 1]} : vector<8x558xbf16> to vector<8x512xbf16>
    %36 = vector.extract_strided_slice %30 {offsets = [0, 24], sizes = [8, 512], strides = [1, 1]} : vector<8x558xbf16> to vector<8x512xbf16>
    %37 = vector.extract_strided_slice %30 {offsets = [0, 44], sizes = [8, 512], strides = [1, 1]} : vector<8x558xbf16> to vector<8x512xbf16>
    %38 = vector.extract_strided_slice %30 {offsets = [0, 45], sizes = [8, 512], strides = [1, 1]} : vector<8x558xbf16> to vector<8x512xbf16>
    %39 = vector.extract_strided_slice %30 {offsets = [0, 46], sizes = [8, 512], strides = [1, 1]} : vector<8x558xbf16> to vector<8x512xbf16>
    %40 = tpu.concatenate %31, %32, %33, %34, %35, %36, %37, %38, %39 in 0 : vector<8x512xbf16>, vector<8x512xbf16>, vector<8x512xbf16>, vector<8x512xbf16>, vector<8x512xbf16>, vector<8x512xbf16>, vector<8x512xbf16>, vector<8x512xbf16>, vector<8x512xbf16> -> vector<72x512xbf16>
    %c0_9 = arith.constant 0 : index
    %c0_10 = arith.constant 0 : index
    %41 = vector.load %arg7[%c0_9, %c0_10] : memref<8x72xbf16, #tpu.memory_space<vmem>>, vector<8x72xbf16>
    %cst_11 = arith.constant dense<0.000000e+00> : vector<8x512xf32>
    %42 = tpu.matmul %41, %40, %cst_11 {dimension_numbers = #tpu.dot_dimension_numbers<[1], [0], [0], [1], [0, 0, 1, 1], [], []>} : vector<8x72xbf16>, vector<72x512xbf16>, vector<8x512xf32> -> vector<8x512xf32>
    %c0_12 = arith.constant 0 : index
    %c0_13 = arith.constant 0 : index
    %43 = vector.load %arg8[%c0_12, %c0_13] : memref<8x1xf32, #tpu.memory_space<vmem>>, vector<8x1xf32>
    %44 = vector.broadcast %43 : vector<8x1xf32> to vector<8x512xf32>
    %45 = arith.addf %42, %44 : vector<8x512xf32>
    %46 = vector.extract_strided_slice %7 {offsets = [0, 59], sizes = [1, 512], strides = [1, 1]} : vector<1x768xf32> to vector<1x512xf32>
    %47 = vector.extract_strided_slice %7 {offsets = [0, 60], sizes = [1, 512], strides = [1, 1]} : vector<1x768xf32> to vector<1x512xf32>
    %48 = vector.extract_strided_slice %7 {offsets = [0, 61], sizes = [1, 512], strides = [1, 1]} : vector<1x768xf32> to vector<1x512xf32>
    %49 = vector.extract_strided_slice %7 {offsets = [0, 62], sizes = [1, 512], strides = [1, 1]} : vector<1x768xf32> to vector<1x512xf32>
    %50 = vector.extract_strided_slice %7 {offsets = [0, 63], sizes = [1, 512], strides = [1, 1]} : vector<1x768xf32> to vector<1x512xf32>
    %51 = vector.extract_strided_slice %7 {offsets = [0, 64], sizes = [1, 512], strides = [1, 1]} : vector<1x768xf32> to vector<1x512xf32>
    %52 = vector.extract_strided_slice %7 {offsets = [0, 65], sizes = [1, 512], strides = [1, 1]} : vector<1x768xf32> to vector<1x512xf32>
    %53 = vector.extract_strided_slice %7 {offsets = [0, 81], sizes = [1, 512], strides = [1, 1]} : vector<1x768xf32> to vector<1x512xf32>
    %54 = vector.extract_strided_slice %7 {offsets = [0, 82], sizes = [1, 512], strides = [1, 1]} : vector<1x768xf32> to vector<1x512xf32>
    %55 = vector.extract_strided_slice %7 {offsets = [0, 83], sizes = [1, 512], strides = [1, 1]} : vector<1x768xf32> to vector<1x512xf32>
    %56 = vector.extract_strided_slice %7 {offsets = [0, 84], sizes = [1, 512], strides = [1, 1]} : vector<1x768xf32> to vector<1x512xf32>
    %57 = vector.extract_strided_slice %7 {offsets = [0, 85], sizes = [1, 512], strides = [1, 1]} : vector<1x768xf32> to vector<1x512xf32>
    %58 = vector.extract_strided_slice %7 {offsets = [0, 86], sizes = [1, 512], strides = [1, 1]} : vector<1x768xf32> to vector<1x512xf32>
    %59 = vector.extract_strided_slice %7 {offsets = [0, 87], sizes = [1, 512], strides = [1, 1]} : vector<1x768xf32> to vector<1x512xf32>
    %60 = vector.extract_strided_slice %7 {offsets = [0, 103], sizes = [1, 512], strides = [1, 1]} : vector<1x768xf32> to vector<1x512xf32>
    %61 = vector.extract_strided_slice %7 {offsets = [0, 104], sizes = [1, 512], strides = [1, 1]} : vector<1x768xf32> to vector<1x512xf32>
    %62 = vector.extract_strided_slice %7 {offsets = [0, 105], sizes = [1, 512], strides = [1, 1]} : vector<1x768xf32> to vector<1x512xf32>
    %63 = vector.extract_strided_slice %7 {offsets = [0, 106], sizes = [1, 512], strides = [1, 1]} : vector<1x768xf32> to vector<1x512xf32>
    %64 = vector.extract_strided_slice %7 {offsets = [0, 107], sizes = [1, 512], strides = [1, 1]} : vector<1x768xf32> to vector<1x512xf32>
    %65 = vector.extract_strided_slice %7 {offsets = [0, 108], sizes = [1, 512], strides = [1, 1]} : vector<1x768xf32> to vector<1x512xf32>
    %66 = vector.extract_strided_slice %7 {offsets = [0, 109], sizes = [1, 512], strides = [1, 1]} : vector<1x768xf32> to vector<1x512xf32>
    %67 = vector.extract_strided_slice %7 {offsets = [0, 125], sizes = [1, 512], strides = [1, 1]} : vector<1x768xf32> to vector<1x512xf32>
    %68 = vector.extract_strided_slice %7 {offsets = [0, 126], sizes = [1, 512], strides = [1, 1]} : vector<1x768xf32> to vector<1x512xf32>
    %69 = vector.extract_strided_slice %7 {offsets = [0, 127], sizes = [1, 512], strides = [1, 1]} : vector<1x768xf32> to vector<1x512xf32>
    %70 = tpu.concatenate %46, %47, %48, %49, %50, %51, %52, %53, %54, %55, %56, %57, %58, %59, %60, %61 in 0 : vector<1x512xf32>, vector<1x512xf32>, vector<1x512xf32>, vector<1x512xf32>, vector<1x512xf32>, vector<1x512xf32>, vector<1x512xf32>, vector<1x512xf32>, vector<1x512xf32>, vector<1x512xf32>, vector<1x512xf32>, vector<1x512xf32>, vector<1x512xf32>, vector<1x512xf32>, vector<1x512xf32>, vector<1x512xf32> -> vector<16x512xf32>
    %71 = tpu.concatenate %62, %63, %64, %65, %66, %67, %68, %69 in 0 : vector<1x512xf32>, vector<1x512xf32>, vector<1x512xf32>, vector<1x512xf32>, vector<1x512xf32>, vector<1x512xf32>, vector<1x512xf32>, vector<1x512xf32> -> vector<8x512xf32>
    %72 = tpu.concatenate %70, %71 in 0 : vector<16x512xf32>, vector<8x512xf32> -> vector<24x512xf32>
    %73 = arith.truncf %72 : vector<24x512xf32> to vector<24x512xbf16>
    %c0_14 = arith.constant 0 : index
    %c0_15 = arith.constant 0 : index
    %74 = vector.load %arg9[%c0_14, %c0_15] : memref<8x24xbf16, #tpu.memory_space<vmem>>, vector<8x24xbf16>
    %cst_16 = arith.constant dense<0.000000e+00> : vector<8x512xf32>
    %75 = tpu.matmul %74, %73, %cst_16 {dimension_numbers = #tpu.dot_dimension_numbers<[1], [0], [0], [1], [0, 0, 1, 1], [], []>} : vector<8x24xbf16>, vector<24x512xbf16>, vector<8x512xf32> -> vector<8x512xf32>
    %c0_17 = arith.constant 0 : index
    %c0_18 = arith.constant 0 : index
    %76 = vector.load %arg10[%c0_17, %c0_18] : memref<8x1xf32, #tpu.memory_space<vmem>>, vector<8x1xf32>
    %77 = vector.broadcast %76 : vector<8x1xf32> to vector<8x512xf32>
    %78 = arith.addf %75, %77 : vector<8x512xf32>
    %79 = tpu.concatenate %78, %45 in 0 : vector<8x512xf32>, vector<8x512xf32> -> vector<16x512xf32>
    %80 = arith.truncf %79 : vector<16x512xf32> to vector<16x512xbf16>
    %c0_19 = arith.constant 0 : index
    %c0_20 = arith.constant 0 : index
    %81 = vector.load %arg11[%c0_19, %c0_20] : memref<8x16xbf16, #tpu.memory_space<vmem>>, vector<8x16xbf16>
    %cst_21 = arith.constant dense<0.000000e+00> : vector<8x512xf32>
    %82 = tpu.matmul %81, %80, %cst_21 {dimension_numbers = #tpu.dot_dimension_numbers<[1], [0], [0], [1], [0, 0, 1, 1], [], []>} : vector<8x16xbf16>, vector<16x512xbf16>, vector<8x512xf32> -> vector<8x512xf32>
    %c0_22 = arith.constant 0 : index
    %c0_23 = arith.constant 0 : index
    %83 = vector.load %arg12[%c0_22, %c0_23] : memref<8x1xf32, #tpu.memory_space<vmem>>, vector<8x1xf32>
    %84 = vector.broadcast %83 : vector<8x1xf32> to vector<8x512xf32>
    %85 = arith.addf %82, %84 : vector<8x512xf32>
    %cst_24 = arith.constant 0.000000e+00 : f32
    %86 = vector.broadcast %cst_24 : f32 to vector<8x512xf32>
    %87 = arith.maximumf %85, %86 : vector<8x512xf32>
    %88 = arith.truncf %87 : vector<8x512xf32> to vector<8x512xbf16>
    %c0_25 = arith.constant 0 : index
    %c0_26 = arith.constant 0 : index
    %89 = vector.load %arg13[%c0_25, %c0_26] : memref<8x8xbf16, #tpu.memory_space<vmem>>, vector<8x8xbf16>
    %cst_27 = arith.constant dense<0.000000e+00> : vector<8x512xf32>
    %90 = tpu.matmul %89, %88, %cst_27 {dimension_numbers = #tpu.dot_dimension_numbers<[1], [0], [0], [1], [0, 0, 1, 1], [], []>} : vector<8x8xbf16>, vector<8x512xbf16>, vector<8x512xf32> -> vector<8x512xf32>
    %c0_28 = arith.constant 0 : index
    %c0_29 = arith.constant 0 : index
    %91 = vector.load %arg14[%c0_28, %c0_29] : memref<8x1xf32, #tpu.memory_space<vmem>>, vector<8x1xf32>
    %92 = vector.broadcast %91 : vector<8x1xf32> to vector<8x512xf32>
    %93 = arith.addf %90, %92 : vector<8x512xf32>
    %cst_30 = arith.constant 0.000000e+00 : f32
    %94 = vector.broadcast %cst_30 : f32 to vector<8x512xf32>
    %95 = arith.maximumf %93, %94 : vector<8x512xf32>
    %96 = arith.truncf %95 : vector<8x512xf32> to vector<8x512xbf16>
    %c0_31 = arith.constant 0 : index
    %c0_32 = arith.constant 0 : index
    %97 = vector.load %arg15[%c0_31, %c0_32] : memref<9x8xbf16, #tpu.memory_space<vmem>>, vector<9x8xbf16>
    %cst_33 = arith.constant dense<0.000000e+00> : vector<9x512xf32>
    %98 = tpu.matmul %97, %96, %cst_33 {dimension_numbers = #tpu.dot_dimension_numbers<[1], [0], [0], [1], [0, 0, 1, 1], [], []>} : vector<9x8xbf16>, vector<8x512xbf16>, vector<9x512xf32> -> vector<9x512xf32>
    %c0_34 = arith.constant 0 : index
    %c0_35 = arith.constant 0 : index
    %99 = vector.load %arg16[%c0_34, %c0_35] : memref<9x1xf32, #tpu.memory_space<vmem>>, vector<9x1xf32>
    %100 = vector.broadcast %99 : vector<9x1xf32> to vector<9x512xf32>
    %101 = arith.addf %98, %100 : vector<9x512xf32>
    %102 = vector.extract_strided_slice %101 {offsets = [0, 0], sizes = [3, 512], strides = [1, 1]} : vector<9x512xf32> to vector<3x512xf32>
    %103 = vector.extract_strided_slice %101 {offsets = [3, 0], sizes = [3, 512], strides = [1, 1]} : vector<9x512xf32> to vector<3x512xf32>
    %104 = vector.extract_strided_slice %101 {offsets = [6, 0], sizes = [3, 512], strides = [1, 1]} : vector<9x512xf32> to vector<3x512xf32>
    %105 = vector.extract_strided_slice %7 {offsets = [0, 128], sizes = [1, 512], strides = [1, 1]} : vector<1x768xf32> to vector<1x512xf32>
    %106 = math.absf %104 : vector<3x512xf32>
    %cst_36 = arith.constant 9.99999997E-7 : f32
    %107 = vector.broadcast %cst_36 : f32 to vector<3x512xf32>
    %108 = arith.maximumf %106, %107 : vector<3x512xf32>
    %cst_37 = arith.constant 1.000000e+00 : f32
    %109 = vector.broadcast %cst_37 : f32 to vector<3x512xf32>
    %110 = arith.divf %109, %108 : vector<3x512xf32>
    %cst_38 = arith.constant 5.000000e-01 : f32
    %111 = vector.broadcast %cst_38 : f32 to vector<1x512xf32>
    %112 = arith.addf %105, %111 : vector<1x512xf32>
    %113 = vector.broadcast %112 : vector<1x512xf32> to vector<3x512xf32>
    %114 = arith.subf %113, %103 : vector<3x512xf32>
    %115 = arith.mulf %114, %110 : vector<3x512xf32>
    %cst_39 = arith.constant 5.000000e-01 : f32
    %116 = vector.broadcast %cst_39 : f32 to vector<1x512xf32>
    %117 = arith.subf %105, %116 : vector<1x512xf32>
    %118 = vector.broadcast %117 : vector<1x512xf32> to vector<3x512xf32>
    %119 = arith.subf %118, %103 : vector<3x512xf32>
    %120 = arith.mulf %119, %110 : vector<3x512xf32>
    %121 = tpu.concatenate %115, %120 in 0 : vector<3x512xf32>, vector<3x512xf32> -> vector<6x512xf32>
    %122 = arith.negf %121 : vector<6x512xf32>
    %123 = math.exp %122 : vector<6x512xf32>
    %cst_40 = arith.constant 1.000000e+00 : f32
    %124 = vector.broadcast %cst_40 : f32 to vector<6x512xf32>
    %125 = arith.addf %124, %123 : vector<6x512xf32>
    %126 = arith.divf %124, %125 : vector<6x512xf32>
    %127 = vector.extract_strided_slice %126 {offsets = [0, 0], sizes = [3, 512], strides = [1, 1]} : vector<6x512xf32> to vector<3x512xf32>
    %128 = vector.extract_strided_slice %126 {offsets = [3, 0], sizes = [3, 512], strides = [1, 1]} : vector<6x512xf32> to vector<3x512xf32>
    %129 = arith.subf %127, %128 : vector<3x512xf32>
    %130 = vector.extract_strided_slice %102 {offsets = [0, 0], sizes = [1, 512], strides = [1, 1]} : vector<3x512xf32> to vector<1x512xf32>
    %131 = vector.extract_strided_slice %102 {offsets = [1, 0], sizes = [1, 512], strides = [1, 1]} : vector<3x512xf32> to vector<1x512xf32>
    %132 = vector.extract_strided_slice %102 {offsets = [2, 0], sizes = [1, 512], strides = [1, 1]} : vector<3x512xf32> to vector<1x512xf32>
    %133 = vector.extract_strided_slice %129 {offsets = [0, 0], sizes = [1, 512], strides = [1, 1]} : vector<3x512xf32> to vector<1x512xf32>
    %134 = vector.extract_strided_slice %129 {offsets = [1, 0], sizes = [1, 512], strides = [1, 1]} : vector<3x512xf32> to vector<1x512xf32>
    %135 = vector.extract_strided_slice %129 {offsets = [2, 0], sizes = [1, 512], strides = [1, 1]} : vector<3x512xf32> to vector<1x512xf32>
    %136 = arith.maximumf %130, %131 : vector<1x512xf32>
    %137 = arith.maximumf %136, %132 : vector<1x512xf32>
    %138 = arith.subf %130, %137 : vector<1x512xf32>
    %139 = math.exp %138 : vector<1x512xf32>
    %140 = arith.subf %131, %137 : vector<1x512xf32>
    %141 = math.exp %140 : vector<1x512xf32>
    %142 = arith.subf %132, %137 : vector<1x512xf32>
    %143 = math.exp %142 : vector<1x512xf32>
    %144 = arith.mulf %139, %133 : vector<1x512xf32>
    %145 = arith.addf %139, %141 : vector<1x512xf32>
    %146 = arith.mulf %141, %134 : vector<1x512xf32>
    %147 = arith.addf %144, %146 : vector<1x512xf32>
    %148 = arith.addf %145, %143 : vector<1x512xf32>
    %149 = arith.mulf %143, %135 : vector<1x512xf32>
    %150 = arith.addf %147, %149 : vector<1x512xf32>
    %151 = arith.divf %150, %148 : vector<1x512xf32>
    %cst_41 = arith.constant 9.99999997E-7 : f32
    %152 = vector.broadcast %cst_41 : f32 to vector<1x512xf32>
    %153 = arith.maximumf %151, %152 : vector<1x512xf32>
    %154 = math.log %153 : vector<1x512xf32>
    %cst_42 = arith.constant 2.000000e+00 : f32
    %155 = math.log %cst_42 : f32
    %156 = vector.broadcast %155 : f32 to vector<1x512xf32>
    %157 = arith.divf %154, %156 : vector<1x512xf32>
    %cst_43 = arith.constant 0.000000e+00 : f32
    %158 = vector.broadcast %cst_43 : f32 to vector<1x512xf32>
    %159 = arith.subf %158, %157 : vector<1x512xf32>
    %cst_44 = arith.constant dense<0.000000e+00> : vector<512xf32>
    %160 = vector.multi_reduction <add>, %159, %cst_44 [0] : vector<1x512xf32> to vector<512xf32>
    %161 = vector.shape_cast %160 : vector<512xf32> to vector<1x512xf32>
    %162 = vector.extract_strided_slice %9 {offsets = [0, 128], sizes = [1, 512], strides = [1, 1]} : vector<1x768xf32> to vector<1x512xf32>
    %163 = arith.mulf %161, %162 : vector<1x512xf32>
    %cst_45 = arith.constant dense<0.000000e+00> : vector<1xf32>
    %164 = vector.multi_reduction <add>, %163, %cst_45 [1] : vector<1x512xf32> to vector<1xf32>
    %165 = vector.shape_cast %164 : vector<1xf32> to vector<1x1xf32>
    %166 = vector.shape_cast %165 : vector<1x1xf32> to vector<1x1x1x1xf32>
    %167 = vector.broadcast %166 : vector<1x1x1x1xf32> to vector<1x1x1x128xf32>
    %c0_46 = arith.constant 0 : index
    %c0_47 = arith.constant 0 : index
    %c0_48 = arith.constant 0 : index
    %c0_49 = arith.constant 0 : index
    %168 = vector.load %arg17[%c0_46, %c0_47, %c0_48, %c0_49] : memref<1x1x1x128xf32, #tpu.memory_space<vmem>>, vector<1x1x1x128xf32>
    tpu.vector_store %arg17[%c0_46, %c0_47, %c0_48, %c0_49], %167 {strides = array<i32>} : memref<1x1x1x128xf32, #tpu.memory_space<vmem>>, vector<1x1x1x128xf32>,
    return
  }
  func.func @transform_0(%arg0: i32, %arg1: i32) -> (i32, i32, i32) {
    %c0_i32 = arith.constant 0 : i32
    %c0_i32_0 = arith.constant 0 : i32
    %c0_i32_1 = arith.constant 0 : i32
    return %arg0, %c0_i32, %c0_i32_0 : i32, i32, i32
  }
  func.func @transform_1(%arg0: i32, %arg1: i32) -> (i32, i32, i32) {
    %c0_i32 = arith.constant 0 : i32
    %c0_i32_0 = arith.constant 0 : i32
    %c0_i32_1 = arith.constant 0 : i32
    return %arg0, %c0_i32, %c0_i32_0 : i32, i32, i32
  }
  func.func @transform_2(%arg0: i32, %arg1: i32) -> (i32, i32) {
    %c0_i32 = arith.constant 0 : i32
    %c0_i32_0 = arith.constant 0 : i32
    %c0_i32_1 = arith.constant 0 : i32
    return %c0_i32, %c0_i32_0 : i32, i32
  }
  func.func @transform_3(%arg0: i32, %arg1: i32) -> (i32, i32) {
    %c0_i32 = arith.constant 0 : i32
    %c0_i32_0 = arith.constant 0 : i32
    %c0_i32_1 = arith.constant 0 : i32
    return %c0_i32, %c0_i32_0 : i32, i32
  }
  func.func @transform_4(%arg0: i32, %arg1: i32) -> (i32, i32) {
    %c0_i32 = arith.constant 0 : i32
    %c0_i32_0 = arith.constant 0 : i32
    %c0_i32_1 = arith.constant 0 : i32
    return %c0_i32, %c0_i32_0 : i32, i32
  }
  func.func @transform_5(%arg0: i32, %arg1: i32) -> (i32, i32) {
    %c0_i32 = arith.constant 0 : i32
    %c0_i32_0 = arith.constant 0 : i32
    %c0_i32_1 = arith.constant 0 : i32
    return %c0_i32, %c0_i32_0 : i32, i32
  }
  func.func @transform_6(%arg0: i32, %arg1: i32) -> (i32, i32) {
    %c0_i32 = arith.constant 0 : i32
    %c0_i32_0 = arith.constant 0 : i32
    %c0_i32_1 = arith.constant 0 : i32
    return %c0_i32, %c0_i32_0 : i32, i32
  }
  func.func @transform_7(%arg0: i32, %arg1: i32) -> (i32, i32) {
    %c0_i32 = arith.constant 0 : i32
    %c0_i32_0 = arith.constant 0 : i32
    %c0_i32_1 = arith.constant 0 : i32
    return %c0_i32, %c0_i32_0 : i32, i32
  }
  func.func @transform_8(%arg0: i32, %arg1: i32) -> (i32, i32) {
    %c0_i32 = arith.constant 0 : i32
    %c0_i32_0 = arith.constant 0 : i32
    %c0_i32_1 = arith.constant 0 : i32
    return %c0_i32, %c0_i32_0 : i32, i32
  }
  func.func @transform_9(%arg0: i32, %arg1: i32) -> (i32, i32) {
    %c0_i32 = arith.constant 0 : i32
    %c0_i32_0 = arith.constant 0 : i32
    %c0_i32_1 = arith.constant 0 : i32
    return %c0_i32, %c0_i32_0 : i32, i32
  }
  func.func @transform_10(%arg0: i32, %arg1: i32) -> (i32, i32) {
    %c0_i32 = arith.constant 0 : i32
    %c0_i32_0 = arith.constant 0 : i32
    %c0_i32_1 = arith.constant 0 : i32
    return %c0_i32, %c0_i32_0 : i32, i32
  }
  func.func @transform_11(%arg0: i32, %arg1: i32) -> (i32, i32) {
    %c0_i32 = arith.constant 0 : i32
    %c0_i32_0 = arith.constant 0 : i32
    %c0_i32_1 = arith.constant 0 : i32
    return %c0_i32, %c0_i32_0 : i32, i32
  }
  func.func @transform_12(%arg0: i32, %arg1: i32) -> (i32, i32) {
    %c0_i32 = arith.constant 0 : i32
    %c0_i32_0 = arith.constant 0 : i32
    %c0_i32_1 = arith.constant 0 : i32
    return %c0_i32, %c0_i32_0 : i32, i32
  }
  func.func @transform_13(%arg0: i32, %arg1: i32) -> (i32, i32) {
    %c0_i32 = arith.constant 0 : i32
    %c0_i32_0 = arith.constant 0 : i32
    %c0_i32_1 = arith.constant 0 : i32
    return %c0_i32, %c0_i32_0 : i32, i32
  }
  func.func @transform_14(%arg0: i32, %arg1: i32) -> (i32, i32) {
    %c0_i32 = arith.constant 0 : i32
    %c0_i32_0 = arith.constant 0 : i32
    %c0_i32_1 = arith.constant 0 : i32
    return %c0_i32, %c0_i32_0 : i32, i32
  }
  func.func @transform_15(%arg0: i32, %arg1: i32) -> (i32, i32, i32, i32) {
    %c0_i32 = arith.constant 0 : i32
    %c0_i32_0 = arith.constant 0 : i32
    %c0_i32_1 = arith.constant 0 : i32
    return %arg0, %arg1, %c0_i32, %c0_i32_0 : i32, i32, i32, i32
  }
}

</mosaic_0001>

<llo_original>
// kernel: hdb_forward.1
$region0: #{hdb_forward.1}
  #allocation0 [shape = 'u32[]', space=smem, size = 0x4, offset = 0x4, fixed_abs, tag = 'smem constant byte address 0x4 - core index']
  #allocation1 [shape = 'u32[144,128]{1,0:T(1,128)}', space=vmem, size = 0x12000, scoped, tag = 'internal scratch']
  %s0 = inlined_call_operand.vmem [shape: bf16[2,1,768], index: 0, kind: input, shape index: {}]
  %s1 = inlined_call_operand.vmem [shape: f32[2,1,768], index: 1, kind: input, shape index: {}]
  %s2 = inlined_call_operand.vmem [shape: f32[1,768], index: 2, kind: input, shape index: {}]
  %s3 = inlined_call_operand.vmem [shape: bf16[8,9], index: 3, kind: input, shape index: {}]
  %s4 = inlined_call_operand.vmem [shape: f32[8,1], index: 4, kind: input, shape index: {}]
  %s5 = inlined_call_operand.vmem [shape: bf16[8,72], index: 5, kind: input, shape index: {}]
  %s6 = inlined_call_operand.vmem [shape: f32[8,1], index: 6, kind: input, shape index: {}]
  %s7 = inlined_call_operand.vmem [shape: bf16[8,24], index: 7, kind: input, shape index: {}]
  %s8 = inlined_call_operand.vmem [shape: f32[8,1], index: 8, kind: input, shape index: {}]
  %s9 = inlined_call_operand.vmem [shape: bf16[8,16], index: 9, kind: input, shape index: {}]
  %s10 = inlined_call_operand.vmem [shape: f32[8,1], index: 10, kind: input, shape index: {}]
  %s11 = inlined_call_operand.vmem [shape: bf16[8,8], index: 11, kind: input, shape index: {}]
  %s12 = inlined_call_operand.vmem [shape: f32[8,1], index: 12, kind: input, shape index: {}]
  %s13 = inlined_call_operand.vmem [shape: bf16[9,8], index: 13, kind: input, shape index: {}]
  %s14 = inlined_call_operand.vmem [shape: f32[9,1], index: 14, kind: input, shape index: {}]
  %s15 = inlined_call_operand.vmem [shape: f32[2,1,1,128], index: 15, kind: output, shape index: {}]
  %s16 = sld [smem:[#allocation0]]
  $region93: #{hdb_forward.1} parent=0
    _
  %s18 = ssub.s32 1, %s16
  %s19 = scalar_select 0, %s18, %s16
  loop: start=0, step=1, limit=4
  $region2: #{hdb_forward.1} parent=0 // loop_pre_header
    _
  $region3: #{hdb_forward.1} parent=0 // loop_header
    %s21 = sphi 0, %s25
    %p22 = scmp.ge.s32.totalorder %s21, 4
    %s28 = sphi 0, %s40
    %s29 = sphi 0, %s36
    %s30 = sphi 0, %s28
    %s31 = sphi 0, %s29
    %s32 = sphi 0, %s30
    %s33 = sphi 0, %s31
    %s43 = sphi 0, %s45
    %s46 = sphi 0, %s43
    %s47 = sphi 0, %s46
    %s63 = sphi 0, %s47
    %s69 = sphi 0, %s71
    %s72 = sphi 0, %s69
    %s73 = sphi 0, %s72
    %s89 = sphi 0, %s73
    %s93 = sphi 0, %s93
    %s95 = sphi 0, %s93
    %s96 = sphi 0, %s95
    %s110 = sphi 0, %s96
    %s114 = sphi 0, %s114
    %s116 = sphi 0, %s114
    %s117 = sphi 0, %s116
    %s131 = sphi 0, %s117
    %s135 = sphi 0, %s135
    %s137 = sphi 0, %s135
    %s138 = sphi 0, %s137
    %s152 = sphi 0, %s138
    %s156 = sphi 0, %s156
    %s158 = sphi 0, %s156
    %s159 = sphi 0, %s158
    %s173 = sphi 0, %s159
    %s177 = sphi 0, %s177
    %s179 = sphi 0, %s177
    %s180 = sphi 0, %s179
    %s194 = sphi 0, %s180
    %s198 = sphi 0, %s198
    %s200 = sphi 0, %s198
    %s201 = sphi 0, %s200
    %s215 = sphi 0, %s201
    %s219 = sphi 0, %s219
    %s221 = sphi 0, %s219
    %s222 = sphi 0, %s221
    %s236 = sphi 0, %s222
    %s240 = sphi 0, %s240
    %s242 = sphi 0, %s240
    %s243 = sphi 0, %s242
    %s257 = sphi 0, %s243
    %s261 = sphi 0, %s261
    %s263 = sphi 0, %s261
    %s264 = sphi 0, %s263
    %s278 = sphi 0, %s264
    %s282 = sphi 0, %s282
    %s284 = sphi 0, %s282
    %s285 = sphi 0, %s284
    %s299 = sphi 0, %s285
    %s303 = sphi 0, %s303
    %s305 = sphi 0, %s303
    %s306 = sphi 0, %s305
    %s320 = sphi 0, %s306
    %s324 = sphi 0, %s324
    %s326 = sphi 0, %s324
    %s327 = sphi 0, %s326
    %s341 = sphi 0, %s327
    %s345 = sphi 0, %s345
    %s347 = sphi 0, %s345
    %s348 = sphi 0, %s347
    %s362 = sphi 0, %s348
    %s370 = sphi 0, %s372
    %s373 = sphi 0, %s370
    %s374 = sphi 0, %s373
    %s390 = sphi 0, %s374
  $region4: #{hdb_forward.1} parent=0 // loop_header_branch
    %24 = sbr.rel (%p22) target = $region8
  $region5: #{hdb_forward.1} parent=0 // loop_body
    %s26 = ssub.s32 %s21, 1
    %s27 = ssub.s32 %s21, 2
    %s34 = sadd.s32 1, %s29
    %p35 = scmp.ge.s32.totalorder %s34, 1
    %s36 = scalar_select %p35, 0, %s34
    %s37 = sadd.s32 1, %s28
    %s38 = scalar_select %p35, %s37, %s28
    %p39 = scmp.ge.s32.totalorder %s38, 2
    %s40 = scalar_select %p39, 0, %s38
    %s41 = ssub.s32 %s28, %s40
    %p42 = scmp.eq.s32.totalorder %s41, 0
    %s44 = sadd.s32 %s43, 1
    %s45 = scalar_select %p42, %s43, %s44
    %p48 = pneg %p42
    %p49 = scmp.eq.s32.totalorder %s21, 1
    %p50 = por %p48, %p49
    %p51 = scmp.ne.s32.totalorder %s43, %s46
    %p52 = scmp.eq.s32.totalorder %s21, 0
    %p53 = por %p51, %p52
    %p54 = scmp.ne.s32.totalorder %s43, %s46
    %p55 = scmp.eq.s32.totalorder %s26, 1
    %p56 = por %p54, %p55
    %p57 = scmp.ne.s32.totalorder %s46, %s47
    %p58 = scmp.eq.s32.totalorder %s26, 0
    %p59 = por %p57, %p58
    %p60 = scmp.ne.s32.totalorder %s46, %s47
    %p61 = scmp.eq.s32.totalorder %s27, 1
    %p62 = por %p60, %p61
    %p64 = scmp.ne.s32.totalorder %s47, %s63
    %p65 = scmp.eq.s32.totalorder %s27, 0
    %p66 = por %p64, %p65
    %s67 = ssub.s32 %s28, %s40
    %p68 = scmp.eq.s32.totalorder %s67, 0
    %s70 = sadd.s32 %s69, 1
    %s71 = scalar_select %p68, %s69, %s70
    %p74 = pneg %p68
    %p75 = scmp.eq.s32.totalorder %s21, 1
    %p76 = por %p74, %p75
    %p77 = scmp.ne.s32.totalorder %s69, %s72
    %p78 = scmp.eq.s32.totalorder %s21, 0
    %p79 = por %p77, %p78
    %p80 = scmp.ne.s32.totalorder %s69, %s72
    %p81 = scmp.eq.s32.totalorder %s26, 1
    %p82 = por %p80, %p81
    %p83 = scmp.ne.s32.totalorder %s72, %s73
    %p84 = scmp.eq.s32.totalorder %s26, 0
    %p85 = por %p83, %p84
    %p86 = scmp.ne.s32.totalorder %s72, %s73
    %p87 = scmp.eq.s32.totalorder %s27, 1
    %p88 = por %p86, %p87
    %p90 = scmp.ne.s32.totalorder %s73, %s89
    %p91 = scmp.eq.s32.totalorder %s27, 0
    %p92 = por %p90, %p91
    %s94 = sadd.s32 %s93, 1
    %p97 = scmp.eq.s32.totalorder %s21, 1
    %p98 = scmp.ne.s32.totalorder %s93, %s95
    %p99 = scmp.eq.s32.totalorder %s21, 0
    %p100 = por %p98, %p99
    %p101 = scmp.ne.s32.totalorder %s93, %s95
    %p102 = scmp.eq.s32.totalorder %s26, 1
    %p103 = por %p101, %p102
    %p104 = scmp.ne.s32.totalorder %s95, %s96
    %p105 = scmp.eq.s32.totalorder %s26, 0
    %p106 = por %p104, %p105
    %p107 = scmp.ne.s32.totalorder %s95, %s96
    %p108 = scmp.eq.s32.totalorder %s27, 1
    %p109 = por %p107, %p108
    %p111 = scmp.ne.s32.totalorder %s96, %s110
    %p112 = scmp.eq.s32.totalorder %s27, 0
    %p113 = por %p111, %p112
    %s115 = sadd.s32 %s114, 1
    %p118 = scmp.eq.s32.totalorder %s21, 1
    %p119 = scmp.ne.s32.totalorder %s114, %s116
    %p120 = scmp.eq.s32.totalorder %s21, 0
    %p121 = por %p119, %p120
    %p122 = scmp.ne.s32.totalorder %s114, %s116
    %p123 = scmp.eq.s32.totalorder %s26, 1
    %p124 = por %p122, %p123
    %p125 = scmp.ne.s32.totalorder %s116, %s117
    %p126 = scmp.eq.s32.totalorder %s26, 0
    %p127 = por %p125, %p126
    %p128 = scmp.ne.s32.totalorder %s116, %s117
    %p129 = scmp.eq.s32.totalorder %s27, 1
    %p130 = por %p128, %p129
    %p132 = scmp.ne.s32.totalorder %s117, %s131
    %p133 = scmp.eq.s32.totalorder %s27, 0
    %p134 = por %p132, %p133
    %s136 = sadd.s32 %s135, 1
    %p139 = scmp.eq.s32.totalorder %s21, 1
    %p140 = scmp.ne.s32.totalorder %s135, %s137
    %p141 = scmp.eq.s32.totalorder %s21, 0
    %p142 = por %p140, %p141
    %p143 = scmp.ne.s32.totalorder %s135, %s137
    %p144 = scmp.eq.s32.totalorder %s26, 1
    %p145 = por %p143, %p144
    %p146 = scmp.ne.s32.totalorder %s137, %s138
    %p147 = scmp.eq.s32.totalorder %s26, 0
    %p148 = por %p146, %p147
    %p149 = scmp.ne.s32.totalorder %s137, %s138
    %p150 = scmp.eq.s32.totalorder %s27, 1
    %p151 = por %p149, %p150
    %p153 = scmp.ne.s32.totalorder %s138, %s152
    %p154 = scmp.eq.s32.totalorder %s27, 0
    %p155 = por %p153, %p154
    %s157 = sadd.s32 %s156, 1
    %p160 = scmp.eq.s32.totalorder %s21, 1
    %p161 = scmp.ne.s32.totalorder %s156, %s158
    %p162 = scmp.eq.s32.totalorder %s21, 0
    %p163 = por %p161, %p162
    %p164 = scmp.ne.s32.totalorder %s156, %s158
    %p165 = scmp.eq.s32.totalorder %s26, 1
    %p166 = por %p164, %p165
    %p167 = scmp.ne.s32.totalorder %s158, %s159
    %p168 = scmp.eq.s32.totalorder %s26, 0
    %p169 = por %p167, %p168
    %p170 = scmp.ne.s32.totalorder %s158, %s159
    %p171 = scmp.eq.s32.totalorder %s27, 1
    %p172 = por %p170, %p171
    %p174 = scmp.ne.s32.totalorder %s159, %s173
    %p175 = scmp.eq.s32.totalorder %s27, 0
    %p176 = por %p174, %p175
    %s178 = sadd.s32 %s177, 1
    %p181 = scmp.eq.s32.totalorder %s21, 1
    %p182 = scmp.ne.s32.totalorder %s177, %s179
    %p183 = scmp.eq.s32.totalorder %s21, 0
    %p184 = por %p182, %p183
    %p185 = scmp.ne.s32.totalorder %s177, %s179
    %p186 = scmp.eq.s32.totalorder %s26, 1
    %p187 = por %p185, %p186
    %p188 = scmp.ne.s32.totalorder %s179, %s180
    %p189 = scmp.eq.s32.totalorder %s26, 0
    %p190 = por %p188, %p189
    %p191 = scmp.ne.s32.totalorder %s179, %s180
    %p192 = scmp.eq.s32.totalorder %s27, 1
    %p193 = por %p191, %p192
    %p195 = scmp.ne.s32.totalorder %s180, %s194
    %p196 = scmp.eq.s32.totalorder %s27, 0
    %p197 = por %p195, %p196
    %s199 = sadd.s32 %s198, 1
    %p202 = scmp.eq.s32.totalorder %s21, 1
    %p203 = scmp.ne.s32.totalorder %s198, %s200
    %p204 = scmp.eq.s32.totalorder %s21, 0
    %p205 = por %p203, %p204
    %p206 = scmp.ne.s32.totalorder %s198, %s200
    %p207 = scmp.eq.s32.totalorder %s26, 1
    %p208 = por %p206, %p207
    %p209 = scmp.ne.s32.totalorder %s200, %s201
    %p210 = scmp.eq.s32.totalorder %s26, 0
    %p211 = por %p209, %p210
    %p212 = scmp.ne.s32.totalorder %s200, %s201
    %p213 = scmp.eq.s32.totalorder %s27, 1
    %p214 = por %p212, %p213
    %p216 = scmp.ne.s32.totalorder %s201, %s215
    %p217 = scmp.eq.s32.totalorder %s27, 0
    %p218 = por %p216, %p217
    %s220 = sadd.s32 %s219, 1
    %p223 = scmp.eq.s32.totalorder %s21, 1
    %p224 = scmp.ne.s32.totalorder %s219, %s221
    %p225 = scmp.eq.s32.totalorder %s21, 0
    %p226 = por %p224, %p225
    %p227 = scmp.ne.s32.totalorder %s219, %s221
    %p228 = scmp.eq.s32.totalorder %s26, 1
    %p229 = por %p227, %p228
    %p230 = scmp.ne.s32.totalorder %s221, %s222
    %p231 = scmp.eq.s32.totalorder %s26, 0
    %p232 = por %p230, %p231
    %p233 = scmp.ne.s32.totalorder %s221, %s222
    %p234 = scmp.eq.s32.totalorder %s27, 1
    %p235 = por %p233, %p234
    %p237 = scmp.ne.s32.totalorder %s222, %s236
    %p238 = scmp.eq.s32.totalorder %s27, 0
    %p239 = por %p237, %p238
    %s241 = sadd.s32 %s240, 1
    %p244 = scmp.eq.s32.totalorder %s21, 1
    %p245 = scmp.ne.s32.totalorder %s240, %s242
    %p246 = scmp.eq.s32.totalorder %s21, 0
    %p247 = por %p245, %p246
    %p248 = scmp.ne.s32.totalorder %s240, %s242
    %p249 = scmp.eq.s32.totalorder %s26, 1
    %p250 = por %p248, %p249
    %p251 = scmp.ne.s32.totalorder %s242, %s243
    %p252 = scmp.eq.s32.totalorder %s26, 0
    %p253 = por %p251, %p252
    %p254 = scmp.ne.s32.totalorder %s242, %s243
    %p255 = scmp.eq.s32.totalorder %s27, 1
    %p256 = por %p254, %p255
    %p258 = scmp.ne.s32.totalorder %s243, %s257
    %p259 = scmp.eq.s32.totalorder %s27, 0
    %p260 = por %p258, %p259
    %s262 = sadd.s32 %s261, 1
    %p265 = scmp.eq.s32.totalorder %s21, 1
    %p266 = scmp.ne.s32.totalorder %s261, %s263
    %p267 = scmp.eq.s32.totalorder %s21, 0
    %p268 = por %p266, %p267
    %p269 = scmp.ne.s32.totalorder %s261, %s263
    %p270 = scmp.eq.s32.totalorder %s26, 1
    %p271 = por %p269, %p270
    %p272 = scmp.ne.s32.totalorder %s263, %s264
    %p273 = scmp.eq.s32.totalorder %s26, 0
    %p274 = por %p272, %p273
    %p275 = scmp.ne.s32.totalorder %s263, %s264
    %p276 = scmp.eq.s32.totalorder %s27, 1
    %p277 = por %p275, %p276
    %p279 = scmp.ne.s32.totalorder %s264, %s278
    %p280 = scmp.eq.s32.totalorder %s27, 0
    %p281 = por %p279, %p280
    %s283 = sadd.s32 %s282, 1
    %p286 = scmp.eq.s32.totalorder %s21, 1
    %p287 = scmp.ne.s32.totalorder %s282, %s284
    %p288 = scmp.eq.s32.totalorder %s21, 0
    %p289 = por %p287, %p288
    %p290 = scmp.ne.s32.totalorder %s282, %s284
    %p291 = scmp.eq.s32.totalorder %s26, 1
    %p292 = por %p290, %p291
    %p293 = scmp.ne.s32.totalorder %s284, %s285
    %p294 = scmp.eq.s32.totalorder %s26, 0
    %p295 = por %p293, %p294
    %p296 = scmp.ne.s32.totalorder %s284, %s285
    %p297 = scmp.eq.s32.totalorder %s27, 1
    %p298 = por %p296, %p297
    %p300 = scmp.ne.s32.totalorder %s285, %s299
    %p301 = scmp.eq.s32.totalorder %s27, 0
    %p302 = por %p300, %p301
    %s304 = sadd.s32 %s303, 1
    %p307 = scmp.eq.s32.totalorder %s21, 1
    %p308 = scmp.ne.s32.totalorder %s303, %s305
    %p309 = scmp.eq.s32.totalorder %s21, 0
    %p310 = por %p308, %p309
    %p311 = scmp.ne.s32.totalorder %s303, %s305
    %p312 = scmp.eq.s32.totalorder %s26, 1
    %p313 = por %p311, %p312
    %p314 = scmp.ne.s32.totalorder %s305, %s306
    %p315 = scmp.eq.s32.totalorder %s26, 0
    %p316 = por %p314, %p315
    %p317 = scmp.ne.s32.totalorder %s305, %s306
    %p318 = scmp.eq.s32.totalorder %s27, 1
    %p319 = por %p317, %p318
    %p321 = scmp.ne.s32.totalorder %s306, %s320
    %p322 = scmp.eq.s32.totalorder %s27, 0
    %p323 = por %p321, %p322
    %s325 = sadd.s32 %s324, 1
    %p328 = scmp.eq.s32.totalorder %s21, 1
    %p329 = scmp.ne.s32.totalorder %s324, %s326
    %p330 = scmp.eq.s32.totalorder %s21, 0
    %p331 = por %p329, %p330
    %p332 = scmp.ne.s32.totalorder %s324, %s326
    %p333 = scmp.eq.s32.totalorder %s26, 1
    %p334 = por %p332, %p333
    %p335 = scmp.ne.s32.totalorder %s326, %s327
    %p336 = scmp.eq.s32.totalorder %s26, 0
    %p337 = por %p335, %p336
    %p338 = scmp.ne.s32.totalorder %s326, %s327
    %p339 = scmp.eq.s32.totalorder %s27, 1
    %p340 = por %p338, %p339
    %p342 = scmp.ne.s32.totalorder %s327, %s341
    %p343 = scmp.eq.s32.totalorder %s27, 0
    %p344 = por %p342, %p343
    %s346 = sadd.s32 %s345, 1
    %p349 = scmp.eq.s32.totalorder %s21, 1
    %p350 = scmp.ne.s32.totalorder %s345, %s347
    %p351 = scmp.eq.s32.totalorder %s21, 0
    %p352 = por %p350, %p351
    %p353 = scmp.ne.s32.totalorder %s345, %s347
    %p354 = scmp.eq.s32.totalorder %s26, 1
    %p355 = por %p353, %p354
    %p356 = scmp.ne.s32.totalorder %s347, %s348
    %p357 = scmp.eq.s32.totalorder %s26, 0
    %p358 = por %p356, %p357
    %p359 = scmp.ne.s32.totalorder %s347, %s348
    %p360 = scmp.eq.s32.totalorder %s27, 1
    %p361 = por %p359, %p360
    %p363 = scmp.ne.s32.totalorder %s348, %s362
    %p364 = scmp.eq.s32.totalorder %s27, 0
    %p365 = por %p363, %p364
    %s366 = ssub.s32 %s28, %s40
    %s367 = ssub.s32 %s29, %s36
    %s368 = sor.u32 %s366, %s367
    %p369 = scmp.eq.s32.totalorder %s368, 0
    %s371 = sadd.s32 %s370, 1
    %s372 = scalar_select %p369, %s370, %s371
    %p375 = pneg %p369
    %p376 = scmp.eq.s32.totalorder %s21, 1
    %p377 = por %p375, %p376
    %p378 = scmp.ne.s32.totalorder %s370, %s373
    %p379 = scmp.eq.s32.totalorder %s21, 0
    %p380 = por %p378, %p379
    %p381 = scmp.ne.s32.totalorder %s370, %s373
    %p382 = scmp.eq.s32.totalorder %s26, 1
    %p383 = por %p381, %p382
    %p384 = scmp.ne.s32.totalorder %s373, %s374
    %p385 = scmp.eq.s32.totalorder %s26, 0
    %p386 = por %p384, %p385
    %p387 = scmp.ne.s32.totalorder %s373, %s374
    %p388 = scmp.eq.s32.totalorder %s27, 1
    %p389 = por %p387, %p388
    %p391 = scmp.ne.s32.totalorder %s374, %s390
    %p392 = scmp.eq.s32.totalorder %s27, 0
    %p393 = por %p391, %p392
    %p394 = scmp.le.s32.totalorder 1, %s21
    %p395 = scmp.lt.s32.totalorder %s21, 3
    %p396 = pnand %p394, %p395
    %p397 = pneg %p396
    // Predicated region
    $region9: #{hdb_forward.1} parent=5 // pred_check
      _
    $region10: #{hdb_forward.1} parent=5 // pred_check_branch
      %399 = sbr.rel (%p396) target = $region12
    $region11: #{hdb_forward.1} parent=5 // pred_region
      %s400 = ssub.s32 %s21, 1
      // Predicated region
      $region13: #{hdb_forward.1} parent=11 // pred_check
        %p401 = pneg %p106
      $region14: #{hdb_forward.1} parent=11 // pred_check_branch
        %403 = sbr.rel (%p401) target = $region16
      $region15: #{hdb_forward.1} parent=11 // pred_region
        _
      $region16: #{hdb_forward.1} parent=11 // pred_fallthru
        _
      // Predicated region
      $region17: #{hdb_forward.1} parent=11 // pred_check
        %p404 = pneg %p127
      $region18: #{hdb_forward.1} parent=11 // pred_check_branch
        %406 = sbr.rel (%p404) target = $region20
      $region19: #{hdb_forward.1} parent=11 // pred_region
        _
      $region20: #{hdb_forward.1} parent=11 // pred_fallthru
        _
      // Predicated region
      $region21: #{hdb_forward.1} parent=11 // pred_check
        %p407 = pneg %p148
      $region22: #{hdb_forward.1} parent=11 // pred_check_branch
        %409 = sbr.rel (%p407) target = $region24
      $region23: #{hdb_forward.1} parent=11 // pred_region
        _
      $region24: #{hdb_forward.1} parent=11 // pred_fallthru
        _
      // Predicated region
      $region25: #{hdb_forward.1} parent=11 // pred_check
        %p410 = pneg %p169
      $region26: #{hdb_forward.1} parent=11 // pred_check_branch
        %412 = sbr.rel (%p410) target = $region28
      $region27: #{hdb_forward.1} parent=11 // pred_region
        _
      $region28: #{hdb_forward.1} parent=11 // pred_fallthru
        _
      // Predicated region
      $region29: #{hdb_forward.1} parent=11 // pred_check
        %p413 = pneg %p190
      $region30: #{hdb_forward.1} parent=11 // pred_check_branch
        %415 = sbr.rel (%p413) target = $region32
      $region31: #{hdb_forward.1} parent=11 // pred_region
        _
      $region32: #{hdb_forward.1} parent=11 // pred_fallthru
        _
      // Predicated region
      $region33: #{hdb_forward.1} parent=11 // pred_check
        %p416 = pneg %p211
      $region34: #{hdb_forward.1} parent=11 // pred_check_branch
        %418 = sbr.rel (%p416) target = $region36
      $region35: #{hdb_forward.1} parent=11 // pred_region
        _
      $region36: #{hdb_forward.1} parent=11 // pred_fallthru
        _
      // Predicated region
      $region37: #{hdb_forward.1} parent=11 // pred_check
        %p419 = pneg %p232
      $region38: #{hdb_forward.1} parent=11 // pred_check_branch
        %421 = sbr.rel (%p419) target = $region40
      $region39: #{hdb_forward.1} parent=11 // pred_region
        _
      $region40: #{hdb_forward.1} parent=11 // pred_fallthru
        _
      // Predicated region
      $region41: #{hdb_forward.1} parent=11 // pred_check
        %p422 = pneg %p253
      $region42: #{hdb_forward.1} parent=11 // pred_check_branch
        %424 = sbr.rel (%p422) target = $region44
      $region43: #{hdb_forward.1} parent=11 // pred_region
        _
      $region44: #{hdb_forward.1} parent=11 // pred_fallthru
        _
      // Predicated region
      $region45: #{hdb_forward.1} parent=11 // pred_check
        %p425 = pneg %p274
      $region46: #{hdb_forward.1} parent=11 // pred_check_branch
        %427 = sbr.rel (%p425) target = $region48
      $region47: #{hdb_forward.1} parent=11 // pred_region
        _
      $region48: #{hdb_forward.1} parent=11 // pred_fallthru
        _
      // Predicated region
      $region49: #{hdb_forward.1} parent=11 // pred_check
        %p428 = pneg %p295
      $region50: #{hdb_forward.1} parent=11 // pred_check_branch
        %430 = sbr.rel (%p428) target = $region52
      $region51: #{hdb_forward.1} parent=11 // pred_region
        _
      $region52: #{hdb_forward.1} parent=11 // pred_fallthru
        _
      // Predicated region
      $region53: #{hdb_forward.1} parent=11 // pred_check
        %p431 = pneg %p316
      $region54: #{hdb_forward.1} parent=11 // pred_check_branch
        %433 = sbr.rel (%p431) target = $region56
      $region55: #{hdb_forward.1} parent=11 // pred_region
        _
      $region56: #{hdb_forward.1} parent=11 // pred_fallthru
        _
      // Predicated region
      $region57: #{hdb_forward.1} parent=11 // pred_check
        %p434 = pneg %p337
      $region58: #{hdb_forward.1} parent=11 // pred_check_branch
        %436 = sbr.rel (%p434) target = $region60
      $region59: #{hdb_forward.1} parent=11 // pred_region
        _
      $region60: #{hdb_forward.1} parent=11 // pred_fallthru
        _
      // Predicated region
      $region61: #{hdb_forward.1} parent=11 // pred_check
        %p437 = pneg %p358
      $region62: #{hdb_forward.1} parent=11 // pred_check_branch
        %439 = sbr.rel (%p437) target = $region64
      $region63: #{hdb_forward.1} parent=11 // pred_region
        _
      $region64: #{hdb_forward.1} parent=11 // pred_fallthru
        _
    $region12: #{hdb_forward.1} parent=5 // pred_fallthru
      _
    %p440 = scmp.lt.s32.totalorder %s21, 2
    // Predicated region
    $region65: #{hdb_forward.1} parent=5 // pred_check
      %p441 = pneg %p440
    $region66: #{hdb_forward.1} parent=5 // pred_check_branch
      %443 = sbr.rel (%p441) target = $region68
    $region67: #{hdb_forward.1} parent=5 // pred_region
      // Predicated region
      $region69: #{hdb_forward.1} parent=67 // pred_check
        %p444 = pneg %p53
      $region70: #{hdb_forward.1} parent=67 // pred_check_branch
        %446 = sbr.rel (%p444) target = $region72
      $region71: #{hdb_forward.1} parent=67 // pred_region
        %p447 = scmp.lt.s32.totalorder %s28, 1
        %s448 = scalar_select %p447, %s28, 1
        %s449 = smul.addr %s448, 6
        %s450 = scalar_lea.vmem %s0, %s449
      $region72: #{hdb_forward.1} parent=67 // pred_fallthru
        _
      // Predicated region
      $region73: #{hdb_forward.1} parent=67 // pred_check
        %p451 = pneg %p79
      $region74: #{hdb_forward.1} parent=67 // pred_check_branch
        %453 = sbr.rel (%p451) target = $region76
      $region75: #{hdb_forward.1} parent=67 // pred_region
        %p454 = scmp.lt.s32.totalorder %s28, 1
        %s455 = scalar_select %p454, %s28, 1
        %s456 = smul.addr %s455, 6
        %s457 = scalar_lea.vmem %s1, %s456
      $region76: #{hdb_forward.1} parent=67 // pred_fallthru
        _
    $region68: #{hdb_forward.1} parent=5 // pred_fallthru
      _
    %p458 = scmp.le.s32.totalorder 1, %s21
    %p459 = scmp.lt.s32.totalorder %s21, 3
    %p460 = pnand %p458, %p459
    %p461 = pneg %p460
    // Predicated region
    $region77: #{hdb_forward.1} parent=5 // pred_check
      _
    $region78: #{hdb_forward.1} parent=5 // pred_check_branch
      %463 = sbr.rel (%p460) target = $region80
    $region79: #{hdb_forward.1} parent=5 // pred_region
      %s464 = ssub.s32 %s21, 1
      %p465 = scmp.lt.s32.totalorder %s30, 1
      %s466 = scalar_select %p465, %s30, 1
      %s467 = smul.addr %s466, 6
      %s468 = scalar_lea.vmem %s0, %s467
      %p469 = pneg %p59
      %p470 = pneg %p56
      %p471 = scmp.lt.s32.totalorder %s30, 1
      %s472 = scalar_select %p471, %s30, 1
      %s473 = smul.addr %s472, 6
      %s474 = scalar_lea.vmem %s1, %s473
      %p475 = pneg %p85
      %p476 = pneg %p82
      %p477 = pneg %p106
      %p478 = pneg %p103
      %p479 = pneg %p127
      %p480 = pneg %p124
      %p481 = pneg %p148
      %p482 = pneg %p145
      %p483 = pneg %p169
      %p484 = pneg %p166
      %p485 = pneg %p190
      %p486 = pneg %p187
      %p487 = pneg %p211
      %p488 = pneg %p208
      %p489 = pneg %p232
      %p490 = pneg %p229
      %p491 = pneg %p253
      %p492 = pneg %p250
      %p493 = pneg %p274
      %p494 = pneg %p271
      %p495 = pneg %p295
      %p496 = pneg %p292
      %p497 = pneg %p316
      %p498 = pneg %p313
      %p499 = pneg %p337
      %p500 = pneg %p334
      %p501 = pneg %p358
      %p502 = pneg %p355
      %p503 = pneg %p386
      %p504 = pneg %p383
      %p505 = scmp.lt.s32.totalorder %s30, 1
      %s506 = scalar_select %p505, %s30, 1
      %p507 = scmp.lt.s32.totalorder %s31, 0
      %s508 = scalar_select %p507, %s31, 0
      %s509 = sadd.s32 %s508, %s506
      %s510 = scalar_lea.vmem %s15, %s509
      %p511 = scmp.lt.s32.totalorder %s30, 1
      %s512 = scalar_select %p511, %s30, 1
      %s513 = smul.addr %s512, 6
      %s514 = scalar_lea.vmem %s0, %s513
      %p515 = scmp.lt.s32.totalorder %s30, 1
      %s516 = scalar_select %p515, %s30, 1
      %s517 = smul.addr %s516, 6
      %s518 = scalar_lea.vmem %s1, %s517
      %p519 = scmp.lt.s32.totalorder %s30, 1
      %s520 = scalar_select %p519, %s30, 1
      %p521 = scmp.lt.s32.totalorder %s31, 0
      %s522 = scalar_select %p521, %s31, 0
      %s523 = sadd.s32 %s522, %s520
      %s524 = scalar_lea.vmem %s15, %s523
      %s526 = smul.u32 %s31, 512
      %s527 = sshra.s32 %s526, 7
      %s528 = sand.u32 %s526, 127
      %s529 = scalar_lea.vmem %s514, %s527
      %v530 = vld [vmem:[%s529] sm:$0x3f]
      %s531 = scalar_lea.vmem %s518, %s527
      %v532 = vld [vmem:[%s531] sm:$0x3f]
      %s533 = scalar_lea.vmem %s2, %s527
      %v534 = vld [vmem:[%s533] sm:$0x3f]
      %v536 = vcombine.high %v530, %v530
      %v538 = vunpack.c.l.s4 1966171168
      %v539 = vunpack.c.0.s8 %v538
      %v540 = vlaneseq
      %v541 = vshrl.u32 %v540, 7
      %v542 = vsub.s32 %v539, %v541
      %v543 = vrot.slane %v530, %v542
      %v545 = vunpack.c.l.s4 1966171168
      %v546 = vunpack.c.0.s8 %v545
      %v547 = vlaneseq
      %v548 = vshrl.u32 %v547, 7
      %v549 = vsub.s32 %v546, %v548
      %v550 = vrot.slane %v536, %v549
      %v551 = vcombine.high %v543, %v543
      %v553 = vunpack.c.l.s4 1966171168
      %v554 = vunpack.c.0.s8 %v553
      %v555 = vlaneseq
      %v556 = vshrl.u32 %v555, 7
      %v557 = vsub.s32 %v554, %v556
      %v558 = vrot.slane %v543, %v557
      %v560 = vunpack.c.l.s4 1966171168
      %v561 = vunpack.c.0.s8 %v560
      %v562 = vlaneseq
      %v563 = vshrl.u32 %v562, 7
      %v564 = vsub.s32 %v561, %v563
      %v565 = vrot.slane %v550, %v564
      %v567 = vunpack.c.l.s4 1966171168
      %v568 = vunpack.c.0.s8 %v567
      %v569 = vlaneseq
      %v570 = vshrl.u32 %v569, 7
      %v571 = vsub.s32 %v568, %v570
      %v572 = vrot.slane %v551, %v571
      %v573 = vcombine.high %v558, %v558
      %v574 = vcombine.high %v572, %v572
      %v580 = vcombine.high %v550, %v550
      %v582 = vunpack.c.l.s4 1966171168
      %v583 = vunpack.c.0.s8 %v582
      %v584 = vlaneseq
      %v585 = vshrl.u32 %v584, 7
      %v586 = vsub.s32 %v583, %v585
      %v587 = vrot.slane %v580, %v586
      %v589 = vshll.u32 %v558, 16
      %v592 = vshll.u32 %v572, 16
      %v595 = vshll.u32 %v573, 16
      %v598 = vshll.u32 %v574, 16
      %v601 = vshll.u32 %v565, 16
      %v604 = vshll.u32 %v587, 16
      %606 = vrot.lane.b32.xlu0 %v589, 127
      %v607 = vpop.permute.xlu0 %606
      %608 = vrot.lane.b32.xlu0 %v592, 127
      %v609 = vpop.permute.xlu0 %608
      %610 = vrot.lane.b32.xlu0 %v595, 127
      %v611 = vpop.permute.xlu0 %610
      %612 = vrot.lane.b32.xlu0 %v598, 127
      %v613 = vpop.permute.xlu0 %612
      %614 = vrot.lane.b32.xlu0 %v601, 127
      %v615 = vpop.permute.xlu0 %614
      %616 = vrot.lane.b32.xlu0 %v604, 127
      %v617 = vpop.permute.xlu0 %616
      %vm618 = vcmask 1039360
      %v619 = vsel %vm618, %v607, %v609
      %v620 = vsel %vm618, %v609, %v611
      %v621 = vsel %vm618, %v611, %v613
      %v622 = vsel %vm618, %v613, %v615
      %v623 = vsel %vm618, %v615, %v617
      %v629 = vcombine.low %v530, %v530
      %v631 = vunpack.c.l.s4 1966171168
      %v632 = vunpack.c.0.s8 %v631
      %v633 = vlaneseq
      %v634 = vshrl.u32 %v633, 7
      %v635 = vsub.s32 %v632, %v634
      %v636 = vrot.slane %v629, %v635
      %v637 = vcombine.high %v636, %v636
      %v639 = vunpack.c.l.s4 1966171168
      %v640 = vunpack.c.0.s8 %v639
      %v641 = vlaneseq
      %v642 = vshrl.u32 %v641, 7
      %v643 = vsub.s32 %v640, %v642
      %v644 = vrot.slane %v636, %v643
      %v646 = vunpack.c.l.s4 1966171168
      %v647 = vunpack.c.0.s8 %v646
      %v648 = vlaneseq
      %v649 = vshrl.u32 %v648, 7
      %v650 = vsub.s32 %v647, %v649
      %v651 = vrot.slane %v637, %v650
      %v652 = vcombine.high %v644, %v644
      %v653 = vcombine.high %v651, %v651
      %654 = vrot.lane.b32.xlu0 %v644, 126
      %v655 = vpop.permute.xlu0 %654
      %656 = vrot.lane.b32.xlu0 %v651, 126
      %v657 = vpop.permute.xlu0 %656
      %658 = vrot.lane.b32.xlu0 %v652, 126
      %v659 = vpop.permute.xlu0 %658
      %660 = vrot.lane.b32.xlu0 %v653, 126
      %v661 = vpop.permute.xlu0 %660
      %662 = vrot.lane.b32.xlu0 %v558, 126
      %v663 = vpop.permute.xlu0 %662
      %664 = vrot.lane.b32.xlu0 %v572, 126
      %v665 = vpop.permute.xlu0 %664
      %vm666 = vcmask 1031168
      %v667 = vsel %vm666, %v655, %v657
      %v668 = vsel %vm666, %v657, %v659
      %v669 = vsel %vm666, %v659, %v661
      %v670 = vsel %vm666, %v661, %v663
      %v671 = vsel %vm666, %v663, %v665
      %v672 = vrot.slane %v589, 7
      %v673 = vrot.slane %v592, 7
      %v674 = vrot.slane %v595, 7
      %v675 = vrot.slane %v598, 7
      %v676 = vrot.slane %v601, 7
      %v677 = vrot.slane %v604, 7
      %678 = vrot.lane.b32.xlu0 %v672, 106
      %v679 = vpop.permute.xlu0 %678
      %680 = vrot.lane.b32.xlu0 %v673, 106
      %v681 = vpop.permute.xlu0 %680
      %682 = vrot.lane.b32.xlu0 %v674, 106
      %v683 = vpop.permute.xlu0 %682
      %684 = vrot.lane.b32.xlu0 %v675, 106
      %v685 = vpop.permute.xlu0 %684
      %686 = vrot.lane.b32.xlu0 %v676, 106
      %v687 = vpop.permute.xlu0 %686
      %688 = vrot.lane.b32.xlu0 %v677, 106
      %v689 = vpop.permute.xlu0 %688
      %vm690 = vcmask 867328
      %v691 = vsel %vm690, %v679, %v681
      %v692 = vsel %vm690, %v681, %v683
      %v693 = vsel %vm690, %v683, %v685
      %v694 = vsel %vm690, %v685, %v687
      %v695 = vsel %vm690, %v687, %v689
      %v701 = vcombine.low %v543, %v543
      %v702 = vcombine.low %v550, %v550
      %v704 = vunpack.c.l.s4 1966171168
      %v705 = vunpack.c.0.s8 %v704
      %v706 = vlaneseq
      %v707 = vshrl.u32 %v706, 7
      %v708 = vsub.s32 %v705, %v707
      %v709 = vrot.slane %v701, %v708
      %v711 = vunpack.c.l.s4 1966171168
      %v712 = vunpack.c.0.s8 %v711
      %v713 = vlaneseq
      %v714 = vshrl.u32 %v713, 7
      %v715 = vsub.s32 %v712, %v714
      %v716 = vrot.slane %v702, %v715
      %v717 = vcombine.high %v709, %v709
      %718 = vrot.lane.b32.xlu0 %v709, 105
      %v719 = vpop.permute.xlu0 %718
      %720 = vrot.lane.b32.xlu0 %v558, 105
      %v721 = vpop.permute.xlu0 %720
      %722 = vrot.lane.b32.xlu0 %v717, 105
      %v723 = vpop.permute.xlu0 %722
      %724 = vrot.lane.b32.xlu0 %v573, 105
      %v725 = vpop.permute.xlu0 %724
      %726 = vrot.lane.b32.xlu0 %v716, 105
      %v727 = vpop.permute.xlu0 %726
      %728 = vrot.lane.b32.xlu0 %v565, 105
      %v729 = vpop.permute.xlu0 %728
      %vm730 = vcmask 859136
      %v731 = vsel %vm730, %v719, %v721
      %v732 = vsel %vm730, %v721, %v723
      %v733 = vsel %vm730, %v723, %v725
      %v734 = vsel %vm730, %v725, %v727
      %v735 = vsel %vm730, %v727, %v729
      %v736 = vrot.slane %v589, 6
      %v737 = vrot.slane %v592, 6
      %v738 = vrot.slane %v595, 6
      %v739 = vrot.slane %v598, 6
      %v740 = vrot.slane %v601, 6
      %v741 = vrot.slane %v604, 6
      %742 = vrot.lane.b32.xlu0 %v736, 104
      %v743 = vpop.permute.xlu0 %742
      %744 = vrot.lane.b32.xlu0 %v737, 104
      %v745 = vpop.permute.xlu0 %744
      %746 = vrot.lane.b32.xlu0 %v738, 104
      %v747 = vpop.permute.xlu0 %746
      %748 = vrot.lane.b32.xlu0 %v739, 104
      %v749 = vpop.permute.xlu0 %748
      %750 = vrot.lane.b32.xlu0 %v740, 104
      %v751 = vpop.permute.xlu0 %750
      %752 = vrot.lane.b32.xlu0 %v741, 104
      %v753 = vpop.permute.xlu0 %752
      %vm754 = vcmask 850944
      %v755 = vsel %vm754, %v743, %v745
      %v756 = vsel %vm754, %v745, %v747
      %v757 = vsel %vm754, %v747, %v749
      %v758 = vsel %vm754, %v749, %v751
      %v759 = vsel %vm754, %v751, %v753
      %v765 = vcombine.low %v636, %v636
      %v767 = vunpack.c.l.s4 1966171168
      %v768 = vunpack.c.0.s8 %v767
      %v769 = vlaneseq
      %v770 = vshrl.u32 %v769, 7
      %v771 = vsub.s32 %v768, %v770
      %v772 = vrot.slane %v765, %v771
      %v773 = vcombine.high %v772, %v772
      %774 = vrot.lane.b32.xlu0 %v772, 84
      %v775 = vpop.permute.xlu0 %774
      %776 = vrot.lane.b32.xlu0 %v644, 84
      %v777 = vpop.permute.xlu0 %776
      %778 = vrot.lane.b32.xlu0 %v773, 84
      %v779 = vpop.permute.xlu0 %778
      %780 = vrot.lane.b32.xlu0 %v652, 84
      %v781 = vpop.permute.xlu0 %780
      %782 = vrot.lane.b32.xlu0 %v709, 84
      %v783 = vpop.permute.xlu0 %782
      %784 = vrot.lane.b32.xlu0 %v558, 84
      %v785 = vpop.permute.xlu0 %784
      %vm786 = vcmask 687104
      %v787 = vsel %vm786, %v775, %v777
      %v788 = vsel %vm786, %v777, %v779
      %v789 = vsel %vm786, %v779, %v781
      %v790 = vsel %vm786, %v781, %v783
      %v791 = vsel %vm786, %v783, %v785
      %v792 = vrot.slane %v589, 5
      %v793 = vrot.slane %v592, 5
      %v794 = vrot.slane %v595, 5
      %v795 = vrot.slane %v598, 5
      %v796 = vrot.slane %v601, 5
      %v797 = vrot.slane %v604, 5
      %798 = vrot.lane.b32.xlu0 %v792, 83
      %v799 = vpop.permute.xlu0 %798
      %800 = vrot.lane.b32.xlu0 %v793, 83
      %v801 = vpop.permute.xlu0 %800
      %802 = vrot.lane.b32.xlu0 %v794, 83
      %v803 = vpop.permute.xlu0 %802
      %804 = vrot.lane.b32.xlu0 %v795, 83
      %v805 = vpop.permute.xlu0 %804
      %806 = vrot.lane.b32.xlu0 %v796, 83
      %v807 = vpop.permute.xlu0 %806
      %808 = vrot.lane.b32.xlu0 %v797, 83
      %v809 = vpop.permute.xlu0 %808
      %vm810 = vcmask 678912
      %v811 = vsel %vm810, %v799, %v801
      %v812 = vsel %vm810, %v801, %v803
      %v813 = vsel %vm810, %v803, %v805
      %v814 = vsel %vm810, %v805, %v807
      %v815 = vsel %vm810, %v807, %v809
      %v821 = vcombine.low %v565, %v565
      %v822 = vcombine.low %v572, %v572
      %v823 = vcombine.low %v587, %v587
      %824 = vrot.lane.b32.xlu0 %v822, 82
      %v825 = vpop.permute.xlu0 %824
      %826 = vrot.lane.b32.xlu0 %v558, 82
      %v827 = vpop.permute.xlu0 %826
      %828 = vrot.lane.b32.xlu0 %v572, 82
      %v829 = vpop.permute.xlu0 %828
      %830 = vrot.lane.b32.xlu0 %v821, 82
      %v831 = vpop.permute.xlu0 %830
      %832 = vrot.lane.b32.xlu0 %v823, 82
      %v833 = vpop.permute.xlu0 %832
      %vm834 = vcmask 670720
      %v835 = vsel %vm834, %v825, %v827
      %v836 = vsel %vm834, %v827, %v829
      %v837 = vsel %vm834, %v829, %v831
      %v838 = vsel %vm834, %v831, %v833
      %vm839 = vcmask 1040384
      %vm840 = vsmask.f32 256
      %vm841 = vmand %vm839, %vm840
      %v842 = vsel %vm841, %v558, %v619
      %v843 = vsel %vm841, %v572, %v620
      %v844 = vsel %vm841, %v573, %v621
      %v845 = vsel %vm841, %v574, %v622
      %v846 = vsel %vm841, %v565, %v623
      %vm847 = vcmask 1040384
      %v850 = vsel %vm847, %v842, %v667
      %v854 = vsel %vm847, %v843, %v668
      %v858 = vsel %vm847, %v844, %v669
      %v862 = vsel %vm847, %v845, %v670
      %v866 = vsel %vm847, %v846, %v671
      %vm868 = vcmask 1041408
      %vm869 = vsmask.f32 1280
      %vm870 = vmand %vm868, %vm869
      %v871 = vsel %vm870, %v850, %v691
      %v872 = vsel %vm870, %v854, %v692
      %v873 = vsel %vm870, %v858, %v693
      %v874 = vsel %vm870, %v862, %v694
      %v875 = vsel %vm870, %v866, %v695
      %vm876 = vcmask 1041408
      %v879 = vsel %vm876, %v871, %v731
      %v883 = vsel %vm876, %v872, %v732
      %v887 = vsel %vm876, %v873, %v733
      %v891 = vsel %vm876, %v874, %v734
      %v895 = vsel %vm876, %v875, %v735
      %vm897 = vcmask 1042432
      %vm898 = vsmask.f32 2304
      %vm899 = vmand %vm897, %vm898
      %v900 = vsel %vm899, %v879, %v755
      %v901 = vsel %vm899, %v883, %v756
      %v902 = vsel %vm899, %v887, %v757
      %v903 = vsel %vm899, %v891, %v758
      %v904 = vsel %vm899, %v895, %v759
      %vm905 = vcmask 1042432
      %v908 = vsel %vm905, %v900, %v787
      %v912 = vsel %vm905, %v901, %v788
      %v916 = vsel %vm905, %v902, %v789
      %v920 = vsel %vm905, %v903, %v790
      %v924 = vsel %vm905, %v904, %v791
      %vm926 = vcmask 1043456
      %vm927 = vsmask.f32 3328
      %vm928 = vmand %vm926, %vm927
      %v929 = vsel %vm928, %v908, %v811
      %v930 = vsel %vm928, %v912, %v812
      %v931 = vsel %vm928, %v916, %v813
      %v932 = vsel %vm928, %v920, %v814
      %v933 = vsel %vm928, %v924, %v815
      %vm934 = vcmask 1043456
      %v937 = vsel %vm934, %v929, %v825
      %v940 = vsel %vm934, %v930, %v835
      %v943 = vsel %vm934, %v931, %v836
      %v946 = vsel %vm934, %v932, %v837
      %v949 = vsel %vm934, %v933, %v838
      %v950 = vld [vmem:[%s3] sm:$0xf]
      %v951 = vld [vmem:[%s4] sm:$0xff]
      %953 = vset.pattern.permute.xlu0 0
      %954 = vperm.xlu0 %953, %v951
      %v955 = vpop.permute.xlu0 %954
      %962 = vrot.lane.b32.xlu0 %v937, 46
      %v963 = vpop.permute.xlu0 %962
      %964 = vrot.lane.b32.xlu0 %v940, 46
      %v965 = vpop.permute.xlu0 %964
      %966 = vrot.lane.b32.xlu0 %v943, 46
      %v967 = vpop.permute.xlu0 %966
      %968 = vrot.lane.b32.xlu0 %v946, 46
      %v969 = vpop.permute.xlu0 %968
      %970 = vrot.lane.b32.xlu0 %v949, 46
      %v971 = vpop.permute.xlu0 %970
      %vm972 = vcmask 375808
      %v973 = vsel %vm972, %v963, %v965
      %v974 = vsel %vm972, %v965, %v967
      %v975 = vsel %vm972, %v967, %v969
      %v976 = vsel %vm972, %v969, %v971
      %vm977 = vcmask 72704
      %v979 = vsel %vm977, %v950, 0
      %vm981 = vcmask 1044480
      %v982 = vsel %vm934, 4294967295, 65535
      %v983 = vsel %vm981, %v982, 0
      %v985 = vand.u32 %v973, %v983
      %v988 = vand.u32 %v974, %v983
      %v991 = vand.u32 %v975, %v983
      %v994 = vand.u32 %v976, %v983
      %v997 = vand.u32 %v971, %v983
      %999 = vmatprep.subr.bf16.mxu0 0
      %1000 = vmatpush1.bf16.msra.mxu0 0
      %1001 = vmatprep.subr.bf16.mxu0 0
      %1002 = vmatpush1.bf16.msra.mxu0 0
      %1003 = vmatprep.subr.bf16.mxu0 0
      %1004 = vmatpush1.bf16.msra.mxu0 0
      %1005 = vmatprep.subr.bf16.mxu0 0
      %1006 = vmatpush1.bf16.msra.mxu0 0
      %1007 = vmatprep.subr.bf16.mxu0 0
      %1008 = vmatpush1.bf16.msra.mxu0 0
      %1009 = vmatprep.subr.bf16.mxu0 0
      %1010 = vmatpush1.bf16.msra.mxu0 0
      %1011 = vmatprep.subr.bf16.mxu0 0
      %1012 = vmatpush1.bf16.msra.mxu0 0
      %1013 = vmatprep.subr.bf16.mxu0 %v988
      %1014 = vmatpush1.bf16.msra.mxu0 %v985
      %1015 = vmatprep.subr.bf16.mxu0 0
      %1016 = vmatpush2.bf16.msra.mxu0 0
      %1017 = vmatprep.subr.bf16.mxu0 0
      %1018 = vmatpush2.bf16.msra.mxu0 0
      %1019 = vmatprep.subr.bf16.mxu0 0
      %1020 = vmatpush2.bf16.msra.mxu0 0
      %1021 = vmatprep.subr.bf16.mxu0 0
      %1022 = vmatpush2.bf16.msra.mxu0 0
      %1023 = vmatprep.subr.bf16.mxu0 0
      %1024 = vmatpush2.bf16.msra.mxu0 0
      %1025 = vmatprep.subr.bf16.mxu0 0
      %1026 = vmatpush2.bf16.msra.mxu0 0
      %1027 = vmatprep.subr.bf16.mxu0 0
      %1028 = vmatpush2.bf16.msra.mxu0 0
      %1029 = vmatprep.subr.bf16.mxu0 0
      %1030 = vmatpush2.bf16.msra.mxu0 0
      %1031 = vmatprep.mubr.bf16.mxu0 0
      %1032 = vmatmul.mubr.bf16.gmra.mxu0 %v979
      %v1033 = vpop.f32.mrf.mxu0
      %v1034 = vadd.f32 %v955, %v1033
      %v1035 = vpop.f32.mrf.mxu0
      %v1036 = vadd.f32 %v955, %v1035
      %v1037 = vpop.f32.mrf.mxu0
      %v1038 = vpop.f32.mrf.mxu0
      %1039 = vdwg.mxu0
      %1040 = vmatprep.subr.bf16.mxu0 0
      %1041 = vmatpush1.bf16.msra.mxu0 0
      %1042 = vmatprep.subr.bf16.mxu0 0
      %1043 = vmatpush1.bf16.msra.mxu0 0
      %1044 = vmatprep.subr.bf16.mxu0 0
      %1045 = vmatpush1.bf16.msra.mxu0 0
      %1046 = vmatprep.subr.bf16.mxu0 0
      %1047 = vmatpush1.bf16.msra.mxu0 0
      %1048 = vmatprep.subr.bf16.mxu0 0
      %1049 = vmatpush1.bf16.msra.mxu0 0
      %1050 = vmatprep.subr.bf16.mxu0 0
      %1051 = vmatpush1.bf16.msra.mxu0 0
      %1052 = vmatprep.subr.bf16.mxu0 0
      %1053 = vmatpush1.bf16.msra.mxu0 0
      %1054 = vmatprep.subr.bf16.mxu0 %v994
      %1055 = vmatpush1.bf16.msra.mxu0 %v991
      %1056 = vmatprep.subr.bf16.mxu0 0
      %1057 = vmatpush2.bf16.msra.mxu0 0
      %1058 = vmatprep.subr.bf16.mxu0 0
      %1059 = vmatpush2.bf16.msra.mxu0 0
      %1060 = vmatprep.subr.bf16.mxu0 0
      %1061 = vmatpush2.bf16.msra.mxu0 0
      %1062 = vmatprep.subr.bf16.mxu0 0
      %1063 = vmatpush2.bf16.msra.mxu0 0
      %1064 = vmatprep.subr.bf16.mxu0 0
      %1065 = vmatpush2.bf16.msra.mxu0 0
      %1066 = vmatprep.subr.bf16.mxu0 0
      %1067 = vmatpush2.bf16.msra.mxu0 0
      %1068 = vmatprep.subr.bf16.mxu0 0
      %1069 = vmatpush2.bf16.msra.mxu0 0
      %1070 = vmatprep.subr.bf16.mxu0 0
      %1071 = vmatpush2.bf16.msra.mxu0 0
      %1072 = vmatprep.mubr.bf16.mxu0 0
      %1073 = vmatmul.mubr.bf16.gmra.mxu0 %v979
      %v1074 = vpop.f32.mrf.mxu0
      %v1075 = vadd.f32 %v955, %v1074
      %v1076 = vpop.f32.mrf.mxu0
      %v1077 = vadd.f32 %v955, %v1076
      %v1078 = vpop.f32.mrf.mxu0
      %v1079 = vpop.f32.mrf.mxu0
      %1080 = vdwg.mxu0
      %1081 = vmatprep.subr.bf16.mxu0 0
      %1082 = vmatpush1.bf16.msra.mxu0 0
      %1083 = vmatprep.subr.bf16.mxu0 0
      %1084 = vmatpush1.bf16.msra.mxu0 0
      %1085 = vmatprep.subr.bf16.mxu0 0
      %1086 = vmatpush1.bf16.msra.mxu0 0
      %1087 = vmatprep.subr.bf16.mxu0 0
      %1088 = vmatpush1.bf16.msra.mxu0 0
      %1089 = vmatprep.subr.bf16.mxu0 0
      %1090 = vmatpush1.bf16.msra.mxu0 0
      %1091 = vmatprep.subr.bf16.mxu0 0
      %1092 = vmatpush1.bf16.msra.mxu0 0
      %1093 = vmatprep.subr.bf16.mxu0 0
      %1094 = vmatpush1.bf16.msra.mxu0 0
      %1095 = vmatprep.subr.bf16.mxu0 0
      %1096 = vmatpush1.bf16.msra.mxu0 %v997
      %1097 = vmatprep.subr.bf16.mxu0 0
      %1098 = vmatpush2.bf16.msra.mxu0 0
      %1099 = vmatprep.subr.bf16.mxu0 0
      %1100 = vmatpush2.bf16.msra.mxu0 0
      %1101 = vmatprep.subr.bf16.mxu0 0
      %1102 = vmatpush2.bf16.msra.mxu0 0
      %1103 = vmatprep.subr.bf16.mxu0 0
      %1104 = vmatpush2.bf16.msra.mxu0 0
      %1105 = vmatprep.subr.bf16.mxu0 0
      %1106 = vmatpush2.bf16.msra.mxu0 0
      %1107 = vmatprep.subr.bf16.mxu0 0
      %1108 = vmatpush2.bf16.msra.mxu0 0
      %1109 = vmatprep.subr.bf16.mxu0 0
      %1110 = vmatpush2.bf16.msra.mxu0 0
      %1111 = vmatprep.subr.bf16.mxu0 0
      %1112 = vmatpush2.bf16.msra.mxu0 0
      %1113 = vmatprep.mubr.bf16.mxu0 0
      %1114 = vmatmul.mubr.bf16.gmra.mxu0 %v979
      %v1115 = vpop.f32.mrf.mxu0
      %v1116 = vadd.f32 %v955, %v1115
      %v1117 = vpop.f32.mrf.mxu0
      %v1118 = vpop.f32.mrf.mxu0
      %v1119 = vpop.f32.mrf.mxu0
      %1120 = vdwg.mxu0
      %v1121 = vmax.f32 %v1034, 0.0
      %v1122 = vmax.f32 %v1036, 0.0
      %v1123 = vmax.f32 %v1075, 0.0
      %v1124 = vmax.f32 %v1077, 0.0
      %v1125 = vmax.f32 %v1116, 0.0
      %v1127 = vlaneseq
      %v1128 = vshrl.u32 %v1127, 7
      %v1129 = vsub.s32 0, %v1128
      %v1130 = vrot.slane %v534, %v1129
      %v1131 = vlaneseq
      %v1132 = vshrl.u32 %v1131, 7
      %v1133 = vsub.s32 1, %v1132
      %v1134 = vrot.slane %v534, %v1133
      %v1135 = vlaneseq
      %v1136 = vshrl.u32 %v1135, 7
      %v1137 = vsub.s32 2, %v1136
      %v1138 = vrot.slane %v534, %v1137
      %v1139 = vlaneseq
      %v1140 = vshrl.u32 %v1139, 7
      %v1141 = vsub.s32 3, %v1140
      %v1142 = vrot.slane %v534, %v1141
      %v1143 = vlaneseq
      %v1144 = vshrl.u32 %v1143, 7
      %v1145 = vsub.s32 4, %v1144
      %v1146 = vrot.slane %v534, %v1145
      %v1147 = vlaneseq
      %v1148 = vshrl.u32 %v1147, 7
      %v1149 = vsub.s32 5, %v1148
      %v1150 = vrot.slane %v534, %v1149
      %1151 = vrot.lane.b32.xlu0 %v1130, 23
      %v1152 = vpop.permute.xlu0 %1151
      %1153 = vrot.lane.b32.xlu0 %v1134, 23
      %v1154 = vpop.permute.xlu0 %1153
      %1155 = vrot.lane.b32.xlu0 %v1138, 23
      %v1156 = vpop.permute.xlu0 %1155
      %1157 = vrot.lane.b32.xlu0 %v1142, 23
      %v1158 = vpop.permute.xlu0 %1157
      %1159 = vrot.lane.b32.xlu0 %v1146, 23
      %v1160 = vpop.permute.xlu0 %1159
      %1161 = vrot.lane.b32.xlu0 %v1150, 23
      %v1162 = vpop.permute.xlu0 %1161
      %vm1163 = vcmask 187392
      %v1164 = vsel %vm1163, %v1152, %v1154
      %v1165 = vsel %vm1163, %v1154, %v1156
      %v1166 = vsel %vm1163, %v1156, %v1158
      %v1167 = vsel %vm1163, %v1158, %v1160
      %v1168 = vsel %vm1163, %v1160, %v1162
      %v1174 = vmul.f32 %v1121, %v1164
      %v1175 = vmul.f32 %v1122, %v1165
      %v1176 = vmul.f32 %v1123, %v1166
      %v1177 = vmul.f32 %v1124, %v1167
      %v1178 = vmul.f32 %v1125, %v1168
      %v1179 = vpack.c.bf16 %v1174, %v1174
      %v1180 = vpack.c.bf16 %v1175, %v1175
      %v1181 = vpack.c.bf16 %v1176, %v1176
      %v1182 = vpack.c.bf16 %v1177, %v1177
      %v1183 = vpack.c.bf16 %v1178, %v1178
      %v1189 = vrot.slane %v1179, 4
      %v1190 = vrot.slane %v1180, 4
      %v1191 = vrot.slane %v1181, 4
      %v1192 = vrot.slane %v1182, 4
      %v1193 = vrot.slane %v1183, 4
      %1194 = vrot.lane.b32.xlu0 %v1189, 127
      %v1195 = vpop.permute.xlu0 %1194
      %1196 = vrot.lane.b32.xlu0 %v1190, 127
      %v1197 = vpop.permute.xlu0 %1196
      %1198 = vrot.lane.b32.xlu0 %v1191, 127
      %v1199 = vpop.permute.xlu0 %1198
      %1200 = vrot.lane.b32.xlu0 %v1192, 127
      %v1201 = vpop.permute.xlu0 %1200
      %1202 = vrot.lane.b32.xlu0 %v1193, 127
      %v1203 = vpop.permute.xlu0 %1202
      %v1204 = vsel %vm618, %v1195, %v1197
      %v1205 = vsel %vm618, %v1197, %v1199
      %v1206 = vsel %vm618, %v1199, %v1201
      %v1207 = vsel %vm618, %v1201, %v1203
      %1208 = vrot.lane.b32.xlu0 %v1179, 126
      %v1209 = vpop.permute.xlu0 %1208
      %1210 = vrot.lane.b32.xlu0 %v1180, 126
      %v1211 = vpop.permute.xlu0 %1210
      %1212 = vrot.lane.b32.xlu0 %v1181, 126
      %v1213 = vpop.permute.xlu0 %1212
      %1214 = vrot.lane.b32.xlu0 %v1182, 126
      %v1215 = vpop.permute.xlu0 %1214
      %1216 = vrot.lane.b32.xlu0 %v1183, 126
      %v1217 = vpop.permute.xlu0 %1216
      %v1218 = vsel %vm666, %v1209, %v1211
      %v1219 = vsel %vm666, %v1211, %v1213
      %v1220 = vsel %vm666, %v1213, %v1215
      %v1221 = vsel %vm666, %v1215, %v1217
      %1222 = vrot.lane.b32.xlu0 %v1189, 106
      %v1223 = vpop.permute.xlu0 %1222
      %1224 = vrot.lane.b32.xlu0 %v1190, 106
      %v1225 = vpop.permute.xlu0 %1224
      %1226 = vrot.lane.b32.xlu0 %v1191, 106
      %v1227 = vpop.permute.xlu0 %1226
      %1228 = vrot.lane.b32.xlu0 %v1192, 106
      %v1229 = vpop.permute.xlu0 %1228
      %1230 = vrot.lane.b32.xlu0 %v1193, 106
      %v1231 = vpop.permute.xlu0 %1230
      %v1232 = vsel %vm690, %v1223, %v1225
      %v1233 = vsel %vm690, %v1225, %v1227
      %v1234 = vsel %vm690, %v1227, %v1229
      %v1235 = vsel %vm690, %v1229, %v1231
      %1236 = vrot.lane.b32.xlu0 %v1179, 105
      %v1237 = vpop.permute.xlu0 %1236
      %1238 = vrot.lane.b32.xlu0 %v1180, 105
      %v1239 = vpop.permute.xlu0 %1238
      %1240 = vrot.lane.b32.xlu0 %v1181, 105
      %v1241 = vpop.permute.xlu0 %1240
      %1242 = vrot.lane.b32.xlu0 %v1182, 105
      %v1243 = vpop.permute.xlu0 %1242
      %1244 = vrot.lane.b32.xlu0 %v1183, 105
      %v1245 = vpop.permute.xlu0 %1244
      %v1246 = vsel %vm730, %v1237, %v1239
      %v1247 = vsel %vm730, %v1239, %v1241
      %v1248 = vsel %vm730, %v1241, %v1243
      %v1249 = vsel %vm730, %v1243, %v1245
      %1250 = vrot.lane.b32.xlu0 %v1189, 104
      %v1251 = vpop.permute.xlu0 %1250
      %1252 = vrot.lane.b32.xlu0 %v1190, 104
      %v1253 = vpop.permute.xlu0 %1252
      %1254 = vrot.lane.b32.xlu0 %v1191, 104
      %v1255 = vpop.permute.xlu0 %1254
      %1256 = vrot.lane.b32.xlu0 %v1192, 104
      %v1257 = vpop.permute.xlu0 %1256
      %1258 = vrot.lane.b32.xlu0 %v1193, 104
      %v1259 = vpop.permute.xlu0 %1258
      %v1260 = vsel %vm754, %v1251, %v1253
      %v1261 = vsel %vm754, %v1253, %v1255
      %v1262 = vsel %vm754, %v1255, %v1257
      %v1263 = vsel %vm754, %v1257, %v1259
      %1264 = vrot.lane.b32.xlu0 %v1179, 84
      %v1265 = vpop.permute.xlu0 %1264
      %1266 = vrot.lane.b32.xlu0 %v1180, 84
      %v1267 = vpop.permute.xlu0 %1266
      %1268 = vrot.lane.b32.xlu0 %v1181, 84
      %v1269 = vpop.permute.xlu0 %1268
      %1270 = vrot.lane.b32.xlu0 %v1182, 84
      %v1271 = vpop.permute.xlu0 %1270
      %1272 = vrot.lane.b32.xlu0 %v1183, 84
      %v1273 = vpop.permute.xlu0 %1272
      %v1274 = vsel %vm786, %v1265, %v1267
      %v1275 = vsel %vm786, %v1267, %v1269
      %v1276 = vsel %vm786, %v1269, %v1271
      %v1277 = vsel %vm786, %v1271, %v1273
      %1278 = vrot.lane.b32.xlu0 %v1189, 83
      %v1279 = vpop.permute.xlu0 %1278
      %1280 = vrot.lane.b32.xlu0 %v1190, 83
      %v1281 = vpop.permute.xlu0 %1280
      %1282 = vrot.lane.b32.xlu0 %v1191, 83
      %v1283 = vpop.permute.xlu0 %1282
      %1284 = vrot.lane.b32.xlu0 %v1192, 83
      %v1285 = vpop.permute.xlu0 %1284
      %1286 = vrot.lane.b32.xlu0 %v1193, 83
      %v1287 = vpop.permute.xlu0 %1286
      %v1288 = vsel %vm810, %v1279, %v1281
      %v1289 = vsel %vm810, %v1281, %v1283
      %v1290 = vsel %vm810, %v1283, %v1285
      %v1291 = vsel %vm810, %v1285, %v1287
      %1292 = vrot.lane.b32.xlu0 %v1179, 82
      %v1293 = vpop.permute.xlu0 %1292
      %1294 = vrot.lane.b32.xlu0 %v1180, 82
      %v1295 = vpop.permute.xlu0 %1294
      %1296 = vrot.lane.b32.xlu0 %v1181, 82
      %v1297 = vpop.permute.xlu0 %1296
      %1298 = vrot.lane.b32.xlu0 %v1182, 82
      %v1299 = vpop.permute.xlu0 %1298
      %1300 = vrot.lane.b32.xlu0 %v1183, 82
      %v1301 = vpop.permute.xlu0 %1300
      %v1302 = vsel %vm834, %v1293, %v1295
      %v1303 = vsel %vm834, %v1295, %v1297
      %v1304 = vsel %vm834, %v1297, %v1299
      %v1305 = vsel %vm834, %v1299, %v1301
      %v1308 = vsel %vm934, %v1179, %v1204
      %v1312 = vsel %vm934, %v1180, %v1205
      %v1316 = vsel %vm934, %v1181, %v1206
      %v1320 = vsel %vm934, %v1182, %v1207
      %v1324 = vsel %vm934, %v1218, %v1232
      %v1328 = vsel %vm934, %v1219, %v1233
      %v1332 = vsel %vm934, %v1220, %v1234
      %v1336 = vsel %vm934, %v1221, %v1235
      %v1340 = vsel %vm934, %v1246, %v1260
      %v1344 = vsel %vm934, %v1247, %v1261
      %v1348 = vsel %vm934, %v1248, %v1262
      %v1352 = vsel %vm934, %v1249, %v1263
      %v1356 = vsel %vm934, %v1274, %v1288
      %v1360 = vsel %vm934, %v1275, %v1289
      %v1364 = vsel %vm934, %v1276, %v1290
      %v1368 = vsel %vm934, %v1277, %v1291
      %v1370 = vld [vmem:[%s5] sm:$0xf]
      %v1371 = vld [vmem:[%s6] sm:$0xff]
      %1373 = vset.pattern.permute.xlu0 0
      %1374 = vperm.xlu0 %1373, %v1371
      %v1375 = vpop.permute.xlu0 %1374
      %vm1377 = vcmask 588800
      %v1379 = vsel %vm1377, %v1370, 0
      %v1382 = vsel %vm934, %v1302, 0
      %v1385 = vsel %vm934, %v1303, 0
      %v1388 = vsel %vm934, %v1304, 0
      %v1391 = vsel %vm934, %v1305, 0
      %1393 = vmatprep.subr.bf16.mxu0 0
      %1394 = vmatpush1.bf16.msra.mxu0 0
      %1395 = vmatprep.subr.bf16.mxu0 0
      %1396 = vmatpush1.bf16.msra.mxu0 0
      %1397 = vmatprep.subr.bf16.mxu0 0
      %1398 = vmatpush1.bf16.msra.mxu0 0
      %1399 = vmatprep.subr.bf16.mxu0 %v1385
      %1400 = vmatpush1.bf16.msra.mxu0 %v1382
      %1401 = vmatprep.subr.bf16.mxu0 %v1360
      %1402 = vmatpush1.bf16.msra.mxu0 %v1356
      %1403 = vmatprep.subr.bf16.mxu0 %v1344
      %1404 = vmatpush1.bf16.msra.mxu0 %v1340
      %1405 = vmatprep.subr.bf16.mxu0 %v1328
      %1406 = vmatpush1.bf16.msra.mxu0 %v1324
      %1407 = vmatprep.subr.bf16.mxu0 %v1312
      %1408 = vmatpush1.bf16.msra.mxu0 %v1308
      %1409 = vmatprep.subr.bf16.mxu0 0
      %1410 = vmatpush2.bf16.msra.mxu0 0
      %1411 = vmatprep.subr.bf16.mxu0 0
      %1412 = vmatpush2.bf16.msra.mxu0 0
      %1413 = vmatprep.subr.bf16.mxu0 0
      %1414 = vmatpush2.bf16.msra.mxu0 0
      %1415 = vmatprep.subr.bf16.mxu0 0
      %1416 = vmatpush2.bf16.msra.mxu0 0
      %1417 = vmatprep.subr.bf16.mxu0 0
      %1418 = vmatpush2.bf16.msra.mxu0 0
      %1419 = vmatprep.subr.bf16.mxu0 0
      %1420 = vmatpush2.bf16.msra.mxu0 0
      %1421 = vmatprep.subr.bf16.mxu0 0
      %1422 = vmatpush2.bf16.msra.mxu0 0
      %1423 = vmatprep.subr.bf16.mxu0 0
      %1424 = vmatpush2.bf16.msra.mxu0 0
      %1425 = vmatprep.mubr.bf16.mxu0 0
      %1426 = vmatmul.mubr.bf16.gmra.mxu0 %v1379
      %v1427 = vpop.f32.mrf.mxu0
      %v1428 = vadd.f32 %v1375, %v1427
      %v1429 = vpop.f32.mrf.mxu0
      %v1430 = vadd.f32 %v1375, %v1429
      %v1431 = vpop.f32.mrf.mxu0
      %v1432 = vpop.f32.mrf.mxu0
      %1433 = vdwg.mxu0
      %1434 = vmatprep.subr.bf16.mxu0 0
      %1435 = vmatpush1.bf16.msra.mxu0 0
      %1436 = vmatprep.subr.bf16.mxu0 0
      %1437 = vmatpush1.bf16.msra.mxu0 0
      %1438 = vmatprep.subr.bf16.mxu0 0
      %1439 = vmatpush1.bf16.msra.mxu0 0
      %1440 = vmatprep.subr.bf16.mxu0 %v1391
      %1441 = vmatpush1.bf16.msra.mxu0 %v1388
      %1442 = vmatprep.subr.bf16.mxu0 %v1368
      %1443 = vmatpush1.bf16.msra.mxu0 %v1364
      %1444 = vmatprep.subr.bf16.mxu0 %v1352
      %1445 = vmatpush1.bf16.msra.mxu0 %v1348
      %1446 = vmatprep.subr.bf16.mxu0 %v1336
      %1447 = vmatpush1.bf16.msra.mxu0 %v1332
      %1448 = vmatprep.subr.bf16.mxu0 %v1320
      %1449 = vmatpush1.bf16.msra.mxu0 %v1316
      %1450 = vmatprep.subr.bf16.mxu0 0
      %1451 = vmatpush2.bf16.msra.mxu0 0
      %1452 = vmatprep.subr.bf16.mxu0 0
      %1453 = vmatpush2.bf16.msra.mxu0 0
      %1454 = vmatprep.subr.bf16.mxu0 0
      %1455 = vmatpush2.bf16.msra.mxu0 0
      %1456 = vmatprep.subr.bf16.mxu0 0
      %1457 = vmatpush2.bf16.msra.mxu0 0
      %1458 = vmatprep.subr.bf16.mxu0 0
      %1459 = vmatpush2.bf16.msra.mxu0 0
      %1460 = vmatprep.subr.bf16.mxu0 0
      %1461 = vmatpush2.bf16.msra.mxu0 0
      %1462 = vmatprep.subr.bf16.mxu0 0
      %1463 = vmatpush2.bf16.msra.mxu0 0
      %1464 = vmatprep.subr.bf16.mxu0 0
      %1465 = vmatpush2.bf16.msra.mxu0 0
      %1466 = vmatprep.mubr.bf16.mxu0 0
      %1467 = vmatmul.mubr.bf16.gmra.mxu0 %v1379
      %v1468 = vpop.f32.mrf.mxu0
      %v1469 = vadd.f32 %v1375, %v1468
      %v1470 = vpop.f32.mrf.mxu0
      %v1471 = vadd.f32 %v1375, %v1470
      %v1472 = vpop.f32.mrf.mxu0
      %v1473 = vpop.f32.mrf.mxu0
      %1474 = vdwg.mxu0
      %v1476 = vlaneseq
      %v1477 = vshrl.u32 %v1476, 7
      %v1478 = vsub.s32 0, %v1477
      %v1479 = vrot.slane %v532, %v1478
      %v1480 = vlaneseq
      %v1481 = vshrl.u32 %v1480, 7
      %v1482 = vsub.s32 1, %v1481
      %v1483 = vrot.slane %v532, %v1482
      %v1484 = vlaneseq
      %v1485 = vshrl.u32 %v1484, 7
      %v1486 = vsub.s32 2, %v1485
      %v1487 = vrot.slane %v532, %v1486
      %v1488 = vlaneseq
      %v1489 = vshrl.u32 %v1488, 7
      %v1490 = vsub.s32 3, %v1489
      %v1491 = vrot.slane %v532, %v1490
      %v1492 = vlaneseq
      %v1493 = vshrl.u32 %v1492, 7
      %v1494 = vsub.s32 4, %v1493
      %v1495 = vrot.slane %v532, %v1494
      %1501 = vrot.lane.b32.xlu0 %v1479, 127
      %v1502 = vpop.permute.xlu0 %1501
      %1503 = vrot.lane.b32.xlu0 %v1483, 127
      %v1504 = vpop.permute.xlu0 %1503
      %1505 = vrot.lane.b32.xlu0 %v1487, 127
      %v1506 = vpop.permute.xlu0 %1505
      %1507 = vrot.lane.b32.xlu0 %v1491, 127
      %v1508 = vpop.permute.xlu0 %1507
      %1509 = vrot.lane.b32.xlu0 %v1495, 127
      %v1510 = vpop.permute.xlu0 %1509
      %vm1511 = vcmask 1039360
      %v1512 = vsel %vm1511, %v1502, %v1504
      %v1513 = vsel %vm1511, %v1504, %v1506
      %v1514 = vsel %vm1511, %v1506, %v1508
      %v1515 = vsel %vm1511, %v1508, %v1510
      %1521 = vrot.lane.b32.xlu0 %v1479, 126
      %v1522 = vpop.permute.xlu0 %1521
      %1523 = vrot.lane.b32.xlu0 %v1483, 126
      %v1524 = vpop.permute.xlu0 %1523
      %1525 = vrot.lane.b32.xlu0 %v1487, 126
      %v1526 = vpop.permute.xlu0 %1525
      %1527 = vrot.lane.b32.xlu0 %v1491, 126
      %v1528 = vpop.permute.xlu0 %1527
      %1529 = vrot.lane.b32.xlu0 %v1495, 126
      %v1530 = vpop.permute.xlu0 %1529
      %vm1531 = vcmask 1031168
      %v1532 = vsel %vm1531, %v1522, %v1524
      %v1533 = vsel %vm1531, %v1524, %v1526
      %v1534 = vsel %vm1531, %v1526, %v1528
      %v1535 = vsel %vm1531, %v1528, %v1530
      %1541 = vrot.lane.b32.xlu0 %v1479, 125
      %v1542 = vpop.permute.xlu0 %1541
      %1543 = vrot.lane.b32.xlu0 %v1483, 125
      %v1544 = vpop.permute.xlu0 %1543
      %1545 = vrot.lane.b32.xlu0 %v1487, 125
      %v1546 = vpop.permute.xlu0 %1545
      %1547 = vrot.lane.b32.xlu0 %v1491, 125
      %v1548 = vpop.permute.xlu0 %1547
      %1549 = vrot.lane.b32.xlu0 %v1495, 125
      %v1550 = vpop.permute.xlu0 %1549
      %vm1551 = vcmask 1022976
      %v1552 = vsel %vm1551, %v1542, %v1544
      %v1553 = vsel %vm1551, %v1544, %v1546
      %v1554 = vsel %vm1551, %v1546, %v1548
      %v1555 = vsel %vm1551, %v1548, %v1550
      %1561 = vrot.lane.b32.xlu0 %v1479, 124
      %v1562 = vpop.permute.xlu0 %1561
      %1563 = vrot.lane.b32.xlu0 %v1483, 124
      %v1564 = vpop.permute.xlu0 %1563
      %1565 = vrot.lane.b32.xlu0 %v1487, 124
      %v1566 = vpop.permute.xlu0 %1565
      %1567 = vrot.lane.b32.xlu0 %v1491, 124
      %v1568 = vpop.permute.xlu0 %1567
      %1569 = vrot.lane.b32.xlu0 %v1495, 124
      %v1570 = vpop.permute.xlu0 %1569
      %vm1571 = vcmask 1014784
      %v1572 = vsel %vm1571, %v1562, %v1564
      %v1573 = vsel %vm1571, %v1564, %v1566
      %v1574 = vsel %vm1571, %v1566, %v1568
      %v1575 = vsel %vm1571, %v1568, %v1570
      %1581 = vrot.lane.b32.xlu0 %v1479, 123
      %v1582 = vpop.permute.xlu0 %1581
      %1583 = vrot.lane.b32.xlu0 %v1483, 123
      %v1584 = vpop.permute.xlu0 %1583
      %1585 = vrot.lane.b32.xlu0 %v1487, 123
      %v1586 = vpop.permute.xlu0 %1585
      %1587 = vrot.lane.b32.xlu0 %v1491, 123
      %v1588 = vpop.permute.xlu0 %1587
      %1589 = vrot.lane.b32.xlu0 %v1495, 123
      %v1590 = vpop.permute.xlu0 %1589
      %vm1591 = vcmask 1006592
      %v1592 = vsel %vm1591, %v1582, %v1584
      %v1593 = vsel %vm1591, %v1584, %v1586
      %v1594 = vsel %vm1591, %v1586, %v1588
      %v1595 = vsel %vm1591, %v1588, %v1590
      %1601 = vrot.lane.b32.xlu0 %v1479, 122
      %v1602 = vpop.permute.xlu0 %1601
      %1603 = vrot.lane.b32.xlu0 %v1483, 122
      %v1604 = vpop.permute.xlu0 %1603
      %1605 = vrot.lane.b32.xlu0 %v1487, 122
      %v1606 = vpop.permute.xlu0 %1605
      %1607 = vrot.lane.b32.xlu0 %v1491, 122
      %v1608 = vpop.permute.xlu0 %1607
      %1609 = vrot.lane.b32.xlu0 %v1495, 122
      %v1610 = vpop.permute.xlu0 %1609
      %vm1611 = vcmask 998400
      %v1612 = vsel %vm1611, %v1602, %v1604
      %v1613 = vsel %vm1611, %v1604, %v1606
      %v1614 = vsel %vm1611, %v1606, %v1608
      %v1615 = vsel %vm1611, %v1608, %v1610
      %1621 = vrot.lane.b32.xlu0 %v1479, 106
      %v1622 = vpop.permute.xlu0 %1621
      %1623 = vrot.lane.b32.xlu0 %v1483, 106
      %v1624 = vpop.permute.xlu0 %1623
      %1625 = vrot.lane.b32.xlu0 %v1487, 106
      %v1626 = vpop.permute.xlu0 %1625
      %1627 = vrot.lane.b32.xlu0 %v1491, 106
      %v1628 = vpop.permute.xlu0 %1627
      %1629 = vrot.lane.b32.xlu0 %v1495, 106
      %v1630 = vpop.permute.xlu0 %1629
      %vm1631 = vcmask 867328
      %v1632 = vsel %vm1631, %v1622, %v1624
      %v1633 = vsel %vm1631, %v1624, %v1626
      %v1634 = vsel %vm1631, %v1626, %v1628
      %v1635 = vsel %vm1631, %v1628, %v1630
      %1641 = vrot.lane.b32.xlu0 %v1479, 105
      %v1642 = vpop.permute.xlu0 %1641
      %1643 = vrot.lane.b32.xlu0 %v1483, 105
      %v1644 = vpop.permute.xlu0 %1643
      %1645 = vrot.lane.b32.xlu0 %v1487, 105
      %v1646 = vpop.permute.xlu0 %1645
      %1647 = vrot.lane.b32.xlu0 %v1491, 105
      %v1648 = vpop.permute.xlu0 %1647
      %1649 = vrot.lane.b32.xlu0 %v1495, 105
      %v1650 = vpop.permute.xlu0 %1649
      %vm1651 = vcmask 859136
      %v1652 = vsel %vm1651, %v1642, %v1644
      %v1653 = vsel %vm1651, %v1644, %v1646
      %v1654 = vsel %vm1651, %v1646, %v1648
      %v1655 = vsel %vm1651, %v1648, %v1650
      %1661 = vrot.lane.b32.xlu0 %v1479, 104
      %v1662 = vpop.permute.xlu0 %1661
      %1663 = vrot.lane.b32.xlu0 %v1483, 104
      %v1664 = vpop.permute.xlu0 %1663
      %1665 = vrot.lane.b32.xlu0 %v1487, 104
      %v1666 = vpop.permute.xlu0 %1665
      %1667 = vrot.lane.b32.xlu0 %v1491, 104
      %v1668 = vpop.permute.xlu0 %1667
      %1669 = vrot.lane.b32.xlu0 %v1495, 104
      %v1670 = vpop.permute.xlu0 %1669
      %vm1671 = vcmask 850944
      %v1672 = vsel %vm1671, %v1662, %v1664
      %v1673 = vsel %vm1671, %v1664, %v1666
      %v1674 = vsel %vm1671, %v1666, %v1668
      %v1675 = vsel %vm1671, %v1668, %v1670
      %1681 = vrot.lane.b32.xlu0 %v1479, 103
      %v1682 = vpop.permute.xlu0 %1681
      %1683 = vrot.lane.b32.xlu0 %v1483, 103
      %v1684 = vpop.permute.xlu0 %1683
      %1685 = vrot.lane.b32.xlu0 %v1487, 103
      %v1686 = vpop.permute.xlu0 %1685
      %1687 = vrot.lane.b32.xlu0 %v1491, 103
      %v1688 = vpop.permute.xlu0 %1687
      %1689 = vrot.lane.b32.xlu0 %v1495, 103
      %v1690 = vpop.permute.xlu0 %1689
      %vm1691 = vcmask 842752
      %v1692 = vsel %vm1691, %v1682, %v1684
      %v1693 = vsel %vm1691, %v1684, %v1686
      %v1694 = vsel %vm1691, %v1686, %v1688
      %v1695 = vsel %vm1691, %v1688, %v1690
      %1701 = vrot.lane.b32.xlu0 %v1479, 102
      %v1702 = vpop.permute.xlu0 %1701
      %1703 = vrot.lane.b32.xlu0 %v1483, 102
      %v1704 = vpop.permute.xlu0 %1703
      %1705 = vrot.lane.b32.xlu0 %v1487, 102
      %v1706 = vpop.permute.xlu0 %1705
      %1707 = vrot.lane.b32.xlu0 %v1491, 102
      %v1708 = vpop.permute.xlu0 %1707
      %1709 = vrot.lane.b32.xlu0 %v1495, 102
      %v1710 = vpop.permute.xlu0 %1709
      %vm1711 = vcmask 834560
      %v1712 = vsel %vm1711, %v1702, %v1704
      %v1713 = vsel %vm1711, %v1704, %v1706
      %v1714 = vsel %vm1711, %v1706, %v1708
      %v1715 = vsel %vm1711, %v1708, %v1710
      %1721 = vrot.lane.b32.xlu0 %v1479, 101
      %v1722 = vpop.permute.xlu0 %1721
      %1723 = vrot.lane.b32.xlu0 %v1483, 101
      %v1724 = vpop.permute.xlu0 %1723
      %1725 = vrot.lane.b32.xlu0 %v1487, 101
      %v1726 = vpop.permute.xlu0 %1725
      %1727 = vrot.lane.b32.xlu0 %v1491, 101
      %v1728 = vpop.permute.xlu0 %1727
      %1729 = vrot.lane.b32.xlu0 %v1495, 101
      %v1730 = vpop.permute.xlu0 %1729
      %vm1731 = vcmask 826368
      %v1732 = vsel %vm1731, %v1722, %v1724
      %v1733 = vsel %vm1731, %v1724, %v1726
      %v1734 = vsel %vm1731, %v1726, %v1728
      %v1735 = vsel %vm1731, %v1728, %v1730
      %1741 = vrot.lane.b32.xlu0 %v1479, 100
      %v1742 = vpop.permute.xlu0 %1741
      %1743 = vrot.lane.b32.xlu0 %v1483, 100
      %v1744 = vpop.permute.xlu0 %1743
      %1745 = vrot.lane.b32.xlu0 %v1487, 100
      %v1746 = vpop.permute.xlu0 %1745
      %1747 = vrot.lane.b32.xlu0 %v1491, 100
      %v1748 = vpop.permute.xlu0 %1747
      %1749 = vrot.lane.b32.xlu0 %v1495, 100
      %v1750 = vpop.permute.xlu0 %1749
      %vm1751 = vcmask 818176
      %v1752 = vsel %vm1751, %v1742, %v1744
      %v1753 = vsel %vm1751, %v1744, %v1746
      %v1754 = vsel %vm1751, %v1746, %v1748
      %v1755 = vsel %vm1751, %v1748, %v1750
      %1761 = vrot.lane.b32.xlu0 %v1479, 84
      %v1762 = vpop.permute.xlu0 %1761
      %1763 = vrot.lane.b32.xlu0 %v1483, 84
      %v1764 = vpop.permute.xlu0 %1763
      %1765 = vrot.lane.b32.xlu0 %v1487, 84
      %v1766 = vpop.permute.xlu0 %1765
      %1767 = vrot.lane.b32.xlu0 %v1491, 84
      %v1768 = vpop.permute.xlu0 %1767
      %1769 = vrot.lane.b32.xlu0 %v1495, 84
      %v1770 = vpop.permute.xlu0 %1769
      %vm1771 = vcmask 687104
      %v1772 = vsel %vm1771, %v1762, %v1764
      %v1773 = vsel %vm1771, %v1764, %v1766
      %v1774 = vsel %vm1771, %v1766, %v1768
      %v1775 = vsel %vm1771, %v1768, %v1770
      %1781 = vrot.lane.b32.xlu0 %v1479, 83
      %v1782 = vpop.permute.xlu0 %1781
      %1783 = vrot.lane.b32.xlu0 %v1483, 83
      %v1784 = vpop.permute.xlu0 %1783
      %1785 = vrot.lane.b32.xlu0 %v1487, 83
      %v1786 = vpop.permute.xlu0 %1785
      %1787 = vrot.lane.b32.xlu0 %v1491, 83
      %v1788 = vpop.permute.xlu0 %1787
      %1789 = vrot.lane.b32.xlu0 %v1495, 83
      %v1790 = vpop.permute.xlu0 %1789
      %vm1791 = vcmask 678912
      %v1792 = vsel %vm1791, %v1782, %v1784
      %v1793 = vsel %vm1791, %v1784, %v1786
      %v1794 = vsel %vm1791, %v1786, %v1788
      %v1795 = vsel %vm1791, %v1788, %v1790
      %v1801 = vsel %vm847, %v1479, %v1512
      %v1802 = vsel %vm847, %v1483, %v1513
      %v1803 = vsel %vm847, %v1487, %v1514
      %v1804 = vsel %vm847, %v1491, %v1515
      %v1805 = vsel %vm847, %v1495, %v1510
      %v1806 = vsel %vm876, %v1801, %v1532
      %v1807 = vsel %vm876, %v1802, %v1533
      %v1808 = vsel %vm876, %v1803, %v1534
      %v1809 = vsel %vm876, %v1804, %v1535
      %v1810 = vsel %vm876, %v1805, %v1530
      %v1811 = vsel %vm905, %v1806, %v1552
      %v1812 = vsel %vm905, %v1807, %v1553
      %v1813 = vsel %vm905, %v1808, %v1554
      %v1814 = vsel %vm905, %v1809, %v1555
      %v1815 = vsel %vm905, %v1810, %v1550
      %v1816 = vsel %vm934, %v1811, %v1572
      %v1817 = vsel %vm934, %v1812, %v1573
      %v1818 = vsel %vm934, %v1813, %v1574
      %v1819 = vsel %vm934, %v1814, %v1575
      %v1820 = vsel %vm934, %v1815, %v1570
      %v1821 = vsel %vm981, %v1816, %v1592
      %v1822 = vsel %vm981, %v1817, %v1593
      %v1823 = vsel %vm981, %v1818, %v1594
      %v1824 = vsel %vm981, %v1819, %v1595
      %v1825 = vsel %vm981, %v1820, %v1590
      %vm1826 = vcmask 1045504
      %v1827 = vsel %vm1826, %v1821, %v1612
      %v1828 = vsel %vm1826, %v1822, %v1613
      %v1829 = vsel %vm1826, %v1823, %v1614
      %v1830 = vsel %vm1826, %v1824, %v1615
      %v1831 = vsel %vm1826, %v1825, %v1610
      %vm1832 = vcmask 1046528
      %v1833 = vsel %vm1832, %v1827, %v1632
      %v1834 = vsel %vm1832, %v1828, %v1633
      %v1835 = vsel %vm1832, %v1829, %v1634
      %v1836 = vsel %vm1832, %v1830, %v1635
      %v1837 = vsel %vm1832, %v1831, %v1630
      %v1838 = vsel %vm847, %v1652, %v1672
      %v1839 = vsel %vm847, %v1653, %v1673
      %v1840 = vsel %vm847, %v1654, %v1674
      %v1841 = vsel %vm847, %v1655, %v1675
      %v1842 = vsel %vm847, %v1650, %v1670
      %v1843 = vsel %vm876, %v1838, %v1692
      %v1844 = vsel %vm876, %v1839, %v1693
      %v1845 = vsel %vm876, %v1840, %v1694
      %v1846 = vsel %vm876, %v1841, %v1695
      %v1847 = vsel %vm876, %v1842, %v1690
      %v1848 = vsel %vm905, %v1843, %v1712
      %v1849 = vsel %vm905, %v1844, %v1713
      %v1850 = vsel %vm905, %v1845, %v1714
      %v1851 = vsel %vm905, %v1846, %v1715
      %v1852 = vsel %vm905, %v1847, %v1710
      %v1853 = vsel %vm934, %v1848, %v1732
      %v1854 = vsel %vm934, %v1849, %v1733
      %v1855 = vsel %vm934, %v1850, %v1734
      %v1856 = vsel %vm934, %v1851, %v1735
      %v1857 = vsel %vm934, %v1852, %v1730
      %v1858 = vsel %vm981, %v1853, %v1752
      %v1859 = vsel %vm981, %v1854, %v1753
      %v1860 = vsel %vm981, %v1855, %v1754
      %v1861 = vsel %vm981, %v1856, %v1755
      %v1862 = vsel %vm981, %v1857, %v1750
      %v1863 = vsel %vm1826, %v1858, %v1772
      %v1864 = vsel %vm1826, %v1859, %v1773
      %v1865 = vsel %vm1826, %v1860, %v1774
      %v1866 = vsel %vm1826, %v1861, %v1775
      %v1867 = vsel %vm1826, %v1862, %v1770
      %v1868 = vsel %vm1832, %v1863, %v1792
      %v1869 = vsel %vm1832, %v1864, %v1793
      %v1870 = vsel %vm1832, %v1865, %v1794
      %v1871 = vsel %vm1832, %v1866, %v1795
      %v1872 = vsel %vm1832, %v1867, %v1790
      %1873 = vrot.lane.b32.xlu0 %v1479, 108
      %v1874 = vpop.permute.xlu0 %1873
      %1875 = vrot.lane.b32.xlu0 %v1483, 108
      %v1876 = vpop.permute.xlu0 %1875
      %1877 = vrot.lane.b32.xlu0 %v1487, 108
      %v1878 = vpop.permute.xlu0 %1877
      %1879 = vrot.lane.b32.xlu0 %v1491, 108
      %v1880 = vpop.permute.xlu0 %1879
      %1881 = vrot.lane.b32.xlu0 %v1495, 108
      %v1882 = vpop.permute.xlu0 %1881
      %vm1883 = vcmask 883712
      %v1884 = vsel %vm1883, %v1874, %v1876
      %v1885 = vsel %vm1883, %v1876, %v1878
      %v1886 = vsel %vm1883, %v1878, %v1880
      %v1887 = vsel %vm1883, %v1880, %v1882
      %1893 = vrot.lane.b32.xlu0 %v1479, 107
      %v1894 = vpop.permute.xlu0 %1893
      %1895 = vrot.lane.b32.xlu0 %v1483, 107
      %v1896 = vpop.permute.xlu0 %1895
      %1897 = vrot.lane.b32.xlu0 %v1487, 107
      %v1898 = vpop.permute.xlu0 %1897
      %1899 = vrot.lane.b32.xlu0 %v1491, 107
      %v1900 = vpop.permute.xlu0 %1899
      %1901 = vrot.lane.b32.xlu0 %v1495, 107
      %v1902 = vpop.permute.xlu0 %1901
      %vm1903 = vcmask 875520
      %v1904 = vsel %vm1903, %v1894, %v1896
      %v1905 = vsel %vm1903, %v1896, %v1898
      %v1906 = vsel %vm1903, %v1898, %v1900
      %v1907 = vsel %vm1903, %v1900, %v1902
      %v1913 = vsel %vm981, %v1816, %v1884
      %v1914 = vsel %vm981, %v1817, %v1885
      %v1915 = vsel %vm981, %v1818, %v1886
      %v1916 = vsel %vm981, %v1819, %v1887
      %v1917 = vsel %vm981, %v1820, %v1882
      %v1918 = vsel %vm1826, %v1913, %v1904
      %v1919 = vsel %vm1826, %v1914, %v1905
      %v1920 = vsel %vm1826, %v1915, %v1906
      %v1921 = vsel %vm1826, %v1916, %v1907
      %v1922 = vsel %vm1826, %v1917, %v1902
      %v1923 = vsel %vm1832, %v1918, %v1632
      %v1924 = vsel %vm1832, %v1919, %v1633
      %v1925 = vsel %vm1832, %v1920, %v1634
      %v1926 = vsel %vm1832, %v1921, %v1635
      %v1927 = vsel %vm1832, %v1922, %v1630
      %1933 = vrot.lane.b32.xlu0 %v1923, 82
      %v1934 = vpop.permute.xlu0 %1933
      %1935 = vrot.lane.b32.xlu0 %v1924, 82
      %v1936 = vpop.permute.xlu0 %1935
      %1937 = vrot.lane.b32.xlu0 %v1925, 82
      %v1938 = vpop.permute.xlu0 %1937
      %1939 = vrot.lane.b32.xlu0 %v1926, 82
      %v1940 = vpop.permute.xlu0 %1939
      %1941 = vrot.lane.b32.xlu0 %v1927, 82
      %v1942 = vpop.permute.xlu0 %1941
      %vm1943 = vcmask 670720
      %v1944 = vsel %vm1943, %v1934, %v1936
      %v1945 = vsel %vm1943, %v1936, %v1938
      %v1946 = vsel %vm1943, %v1938, %v1940
      %v1947 = vsel %vm1943, %v1940, %v1942
      %v1953 = vpack.c.bf16 %v1868, %v1833
      %v1954 = vpack.c.bf16 %v1869, %v1834
      %v1955 = vpack.c.bf16 %v1870, %v1835
      %v1956 = vpack.c.bf16 %v1871, %v1836
      %v1957 = vpack.c.bf16 %v1872, %v1837
      %v1958 = vpack.c.bf16 %v1944, %v1944
      %v1959 = vpack.c.bf16 %v1945, %v1945
      %v1960 = vpack.c.bf16 %v1946, %v1946
      %v1961 = vpack.c.bf16 %v1947, %v1947
      %v1962 = vpack.c.bf16 %v1942, %v1942
      %v1963 = vld [vmem:[%s7] sm:$0xf]
      %v1964 = vld [vmem:[%s8] sm:$0xff]
      %1966 = vset.pattern.permute.xlu0 0
      %1967 = vperm.xlu0 %1966, %v1964
      %v1968 = vpop.permute.xlu0 %1967
      %1980 = vrot.lane.b32.xlu0 %v1953, 69
      %v1981 = vpop.permute.xlu0 %1980
      %1982 = vrot.lane.b32.xlu0 %v1954, 69
      %v1983 = vpop.permute.xlu0 %1982
      %1984 = vrot.lane.b32.xlu0 %v1955, 69
      %v1985 = vpop.permute.xlu0 %1984
      %1986 = vrot.lane.b32.xlu0 %v1956, 69
      %v1987 = vpop.permute.xlu0 %1986
      %1988 = vrot.lane.b32.xlu0 %v1957, 69
      %v1989 = vpop.permute.xlu0 %1988
      %1990 = vrot.lane.b32.xlu0 %v1958, 69
      %v1991 = vpop.permute.xlu0 %1990
      %1992 = vrot.lane.b32.xlu0 %v1959, 69
      %v1993 = vpop.permute.xlu0 %1992
      %1994 = vrot.lane.b32.xlu0 %v1960, 69
      %v1995 = vpop.permute.xlu0 %1994
      %1996 = vrot.lane.b32.xlu0 %v1961, 69
      %v1997 = vpop.permute.xlu0 %1996
      %1998 = vrot.lane.b32.xlu0 %v1962, 69
      %v1999 = vpop.permute.xlu0 %1998
      %vm2000 = vcmask 564224
      %v2001 = vsel %vm2000, %v1981, %v1983
      %v2002 = vsel %vm2000, %v1983, %v1985
      %v2003 = vsel %vm2000, %v1985, %v1987
      %v2004 = vsel %vm2000, %v1987, %v1989
      %v2005 = vsel %vm2000, %v1991, %v1993
      %v2006 = vsel %vm2000, %v1993, %v1995
      %v2007 = vsel %vm2000, %v1995, %v1997
      %v2008 = vsel %vm2000, %v1997, %v1999
      %vm2013 = vcmask 195584
      %v2015 = vsel %vm2013, %v1963, 0
      %v2018 = vsel %vm934, %v2005, 0
      %v2021 = vsel %vm934, %v2006, 0
      %v2024 = vsel %vm934, %v2007, 0
      %v2027 = vsel %vm934, %v2008, 0
      %2029 = vmatprep.subr.bf16.mxu0 0
      %2030 = vmatpush1.bf16.msra.mxu0 0
      %2031 = vmatprep.subr.bf16.mxu0 0
      %2032 = vmatpush1.bf16.msra.mxu0 0
      %2033 = vmatprep.subr.bf16.mxu0 0
      %2034 = vmatpush1.bf16.msra.mxu0 0
      %2035 = vmatprep.subr.bf16.mxu0 0
      %2036 = vmatpush1.bf16.msra.mxu0 0
      %2037 = vmatprep.subr.bf16.mxu0 0
      %2038 = vmatpush1.bf16.msra.mxu0 0
      %2039 = vmatprep.subr.bf16.mxu0 0
      %2040 = vmatpush1.bf16.msra.mxu0 0
      %2041 = vmatprep.subr.bf16.mxu0 %v2021
      %2042 = vmatpush1.bf16.msra.mxu0 %v2018
      %2043 = vmatprep.subr.bf16.mxu0 %v2002
      %2044 = vmatpush1.bf16.msra.mxu0 %v2001
      %2045 = vmatprep.subr.bf16.mxu0 0
      %2046 = vmatpush2.bf16.msra.mxu0 0
      %2047 = vmatprep.subr.bf16.mxu0 0
      %2048 = vmatpush2.bf16.msra.mxu0 0
      %2049 = vmatprep.subr.bf16.mxu0 0
      %2050 = vmatpush2.bf16.msra.mxu0 0
      %2051 = vmatprep.subr.bf16.mxu0 0
      %2052 = vmatpush2.bf16.msra.mxu0 0
      %2053 = vmatprep.subr.bf16.mxu0 0
      %2054 = vmatpush2.bf16.msra.mxu0 0
      %2055 = vmatprep.subr.bf16.mxu0 0
      %2056 = vmatpush2.bf16.msra.mxu0 0
      %2057 = vmatprep.subr.bf16.mxu0 0
      %2058 = vmatpush2.bf16.msra.mxu0 0
      %2059 = vmatprep.subr.bf16.mxu0 0
      %2060 = vmatpush2.bf16.msra.mxu0 0
      %2061 = vmatprep.mubr.bf16.mxu0 0
      %2062 = vmatmul.mubr.bf16.gmra.mxu0 %v2015
      %v2063 = vpop.f32.mrf.mxu0
      %v2064 = vadd.f32 %v1968, %v2063
      %v2065 = vpop.f32.mrf.mxu0
      %v2066 = vadd.f32 %v1968, %v2065
      %v2067 = vpop.f32.mrf.mxu0
      %v2068 = vpop.f32.mrf.mxu0
      %2069 = vdwg.mxu0
      %2070 = vmatprep.subr.bf16.mxu0 0
      %2071 = vmatpush1.bf16.msra.mxu0 0
      %2072 = vmatprep.subr.bf16.mxu0 0
      %2073 = vmatpush1.bf16.msra.mxu0 0
      %2074 = vmatprep.subr.bf16.mxu0 0
      %2075 = vmatpush1.bf16.msra.mxu0 0
      %2076 = vmatprep.subr.bf16.mxu0 0
      %2077 = vmatpush1.bf16.msra.mxu0 0
      %2078 = vmatprep.subr.bf16.mxu0 0
      %2079 = vmatpush1.bf16.msra.mxu0 0
      %2080 = vmatprep.subr.bf16.mxu0 0
      %2081 = vmatpush1.bf16.msra.mxu0 0
      %2082 = vmatprep.subr.bf16.mxu0 %v2027
      %2083 = vmatpush1.bf16.msra.mxu0 %v2024
      %2084 = vmatprep.subr.bf16.mxu0 %v2004
      %2085 = vmatpush1.bf16.msra.mxu0 %v2003
      %2086 = vmatprep.subr.bf16.mxu0 0
      %2087 = vmatpush2.bf16.msra.mxu0 0
      %2088 = vmatprep.subr.bf16.mxu0 0
      %2089 = vmatpush2.bf16.msra.mxu0 0
      %2090 = vmatprep.subr.bf16.mxu0 0
      %2091 = vmatpush2.bf16.msra.mxu0 0
      %2092 = vmatprep.subr.bf16.mxu0 0
      %2093 = vmatpush2.bf16.msra.mxu0 0
      %2094 = vmatprep.subr.bf16.mxu0 0
      %2095 = vmatpush2.bf16.msra.mxu0 0
      %2096 = vmatprep.subr.bf16.mxu0 0
      %2097 = vmatpush2.bf16.msra.mxu0 0
      %2098 = vmatprep.subr.bf16.mxu0 0
      %2099 = vmatpush2.bf16.msra.mxu0 0
      %2100 = vmatprep.subr.bf16.mxu0 0
      %2101 = vmatpush2.bf16.msra.mxu0 0
      %2102 = vmatprep.mubr.bf16.mxu0 0
      %2103 = vmatmul.mubr.bf16.gmra.mxu0 %v2015
      %v2104 = vpop.f32.mrf.mxu0
      %v2105 = vadd.f32 %v1968, %v2104
      %v2106 = vpop.f32.mrf.mxu0
      %v2107 = vadd.f32 %v1968, %v2106
      %v2108 = vpop.f32.mrf.mxu0
      %v2109 = vpop.f32.mrf.mxu0
      %2110 = vdwg.mxu0
      %v2111 = vpack.c.bf16 %v1428, %v2064
      %v2112 = vpack.c.bf16 %v1430, %v2066
      %v2113 = vpack.c.bf16 %v1469, %v2105
      %v2114 = vpack.c.bf16 %v1471, %v2107
      %v2115 = vld [vmem:[%s9] sm:$0xf]
      %v2116 = vld [vmem:[%s10] sm:$0xff]
      %2118 = vset.pattern.permute.xlu0 0
      %2119 = vperm.xlu0 %2118, %v2116
      %v2120 = vpop.permute.xlu0 %2119
      %vm2122 = vcmask 130048
      %v2124 = vsel %vm2122, %v2115, 0
      %2126 = vmatprep.subr.bf16.mxu0 0
      %2127 = vmatpush1.bf16.msra.mxu0 0
      %2128 = vmatprep.subr.bf16.mxu0 0
      %2129 = vmatpush1.bf16.msra.mxu0 0
      %2130 = vmatprep.subr.bf16.mxu0 0
      %2131 = vmatpush1.bf16.msra.mxu0 0
      %2132 = vmatprep.subr.bf16.mxu0 0
      %2133 = vmatpush1.bf16.msra.mxu0 0
      %2134 = vmatprep.subr.bf16.mxu0 0
      %2135 = vmatpush1.bf16.msra.mxu0 0
      %2136 = vmatprep.subr.bf16.mxu0 0
      %2137 = vmatpush1.bf16.msra.mxu0 0
      %2138 = vmatprep.subr.bf16.mxu0 0
      %2139 = vmatpush1.bf16.msra.mxu0 0
      %2140 = vmatprep.subr.bf16.mxu0 %v2112
      %2141 = vmatpush1.bf16.msra.mxu0 %v2111
      %2142 = vmatprep.subr.bf16.mxu0 0
      %2143 = vmatpush2.bf16.msra.mxu0 0
      %2144 = vmatprep.subr.bf16.mxu0 0
      %2145 = vmatpush2.bf16.msra.mxu0 0
      %2146 = vmatprep.subr.bf16.mxu0 0
      %2147 = vmatpush2.bf16.msra.mxu0 0
      %2148 = vmatprep.subr.bf16.mxu0 0
      %2149 = vmatpush2.bf16.msra.mxu0 0
      %2150 = vmatprep.subr.bf16.mxu0 0
      %2151 = vmatpush2.bf16.msra.mxu0 0
      %2152 = vmatprep.subr.bf16.mxu0 0
      %2153 = vmatpush2.bf16.msra.mxu0 0
      %2154 = vmatprep.subr.bf16.mxu0 0
      %2155 = vmatpush2.bf16.msra.mxu0 0
      %2156 = vmatprep.subr.bf16.mxu0 0
      %2157 = vmatpush2.bf16.msra.mxu0 0
      %2158 = vmatprep.mubr.bf16.mxu0 0
      %2159 = vmatmul.mubr.bf16.gmra.mxu0 %v2124
      %v2160 = vpop.f32.mrf.mxu0
      %v2161 = vadd.f32 %v2120, %v2160
      %v2162 = vpop.f32.mrf.mxu0
      %v2163 = vadd.f32 %v2120, %v2162
      %v2164 = vpop.f32.mrf.mxu0
      %v2165 = vpop.f32.mrf.mxu0
      %2166 = vdwg.mxu0
      %2167 = vmatprep.subr.bf16.mxu0 0
      %2168 = vmatpush1.bf16.msra.mxu0 0
      %2169 = vmatprep.subr.bf16.mxu0 0
      %2170 = vmatpush1.bf16.msra.mxu0 0
      %2171 = vmatprep.subr.bf16.mxu0 0
      %2172 = vmatpush1.bf16.msra.mxu0 0
      %2173 = vmatprep.subr.bf16.mxu0 0
      %2174 = vmatpush1.bf16.msra.mxu0 0
      %2175 = vmatprep.subr.bf16.mxu0 0
      %2176 = vmatpush1.bf16.msra.mxu0 0
      %2177 = vmatprep.subr.bf16.mxu0 0
      %2178 = vmatpush1.bf16.msra.mxu0 0
      %2179 = vmatprep.subr.bf16.mxu0 0
      %2180 = vmatpush1.bf16.msra.mxu0 0
      %2181 = vmatprep.subr.bf16.mxu0 %v2114
      %2182 = vmatpush1.bf16.msra.mxu0 %v2113
      %2183 = vmatprep.subr.bf16.mxu0 0
      %2184 = vmatpush2.bf16.msra.mxu0 0
      %2185 = vmatprep.subr.bf16.mxu0 0
      %2186 = vmatpush2.bf16.msra.mxu0 0
      %2187 = vmatprep.subr.bf16.mxu0 0
      %2188 = vmatpush2.bf16.msra.mxu0 0
      %2189 = vmatprep.subr.bf16.mxu0 0
      %2190 = vmatpush2.bf16.msra.mxu0 0
      %2191 = vmatprep.subr.bf16.mxu0 0
      %2192 = vmatpush2.bf16.msra.mxu0 0
      %2193 = vmatprep.subr.bf16.mxu0 0
      %2194 = vmatpush2.bf16.msra.mxu0 0
      %2195 = vmatprep.subr.bf16.mxu0 0
      %2196 = vmatpush2.bf16.msra.mxu0 0
      %2197 = vmatprep.subr.bf16.mxu0 0
      %2198 = vmatpush2.bf16.msra.mxu0 0
      %2199 = vmatprep.mubr.bf16.mxu0 0
      %2200 = vmatmul.mubr.bf16.gmra.mxu0 %v2124
      %v2201 = vpop.f32.mrf.mxu0
      %v2202 = vadd.f32 %v2120, %v2201
      %v2203 = vpop.f32.mrf.mxu0
      %v2204 = vadd.f32 %v2120, %v2203
      %v2205 = vpop.f32.mrf.mxu0
      %v2206 = vpop.f32.mrf.mxu0
      %2207 = vdwg.mxu0
      %v2208 = vmax.f32 %v2161, 0.0
      %v2209 = vmax.f32 %v2163, 0.0
      %v2210 = vmax.f32 %v2202, 0.0
      %v2211 = vmax.f32 %v2204, 0.0
      %v2212 = vpack.c.bf16 %v2208, %v2208
      %v2213 = vpack.c.bf16 %v2209, %v2209
      %v2214 = vpack.c.bf16 %v2210, %v2210
      %v2215 = vpack.c.bf16 %v2211, %v2211
      %v2216 = vld [vmem:[%s11] sm:$0xf]
      %v2217 = vld [vmem:[%s12] sm:$0xff]
      %2219 = vset.pattern.permute.xlu0 0
      %2220 = vperm.xlu0 %2219, %v2217
      %v2221 = vpop.permute.xlu0 %2220
      %vm2223 = vcmask 64512
      %v2225 = vsel %vm2223, %v2216, 0
      %v2228 = vsel %vm934, %v2212, 0
      %v2231 = vsel %vm934, %v2213, 0
      %v2234 = vsel %vm934, %v2214, 0
      %v2237 = vsel %vm934, %v2215, 0
      %2239 = vmatprep.subr.bf16.mxu0 0
      %2240 = vmatpush1.bf16.msra.mxu0 0
      %2241 = vmatprep.subr.bf16.mxu0 0
      %2242 = vmatpush1.bf16.msra.mxu0 0
      %2243 = vmatprep.subr.bf16.mxu0 0
      %2244 = vmatpush1.bf16.msra.mxu0 0
      %2245 = vmatprep.subr.bf16.mxu0 0
      %2246 = vmatpush1.bf16.msra.mxu0 0
      %2247 = vmatprep.subr.bf16.mxu0 0
      %2248 = vmatpush1.bf16.msra.mxu0 0
      %2249 = vmatprep.subr.bf16.mxu0 0
      %2250 = vmatpush1.bf16.msra.mxu0 0
      %2251 = vmatprep.subr.bf16.mxu0 0
      %2252 = vmatpush1.bf16.msra.mxu0 0
      %2253 = vmatprep.subr.bf16.mxu0 %v2231
      %2254 = vmatpush1.bf16.msra.mxu0 %v2228
      %2255 = vmatprep.subr.bf16.mxu0 0
      %2256 = vmatpush2.bf16.msra.mxu0 0
      %2257 = vmatprep.subr.bf16.mxu0 0
      %2258 = vmatpush2.bf16.msra.mxu0 0
      %2259 = vmatprep.subr.bf16.mxu0 0
      %2260 = vmatpush2.bf16.msra.mxu0 0
      %2261 = vmatprep.subr.bf16.mxu0 0
      %2262 = vmatpush2.bf16.msra.mxu0 0
      %2263 = vmatprep.subr.bf16.mxu0 0
      %2264 = vmatpush2.bf16.msra.mxu0 0
      %2265 = vmatprep.subr.bf16.mxu0 0
      %2266 = vmatpush2.bf16.msra.mxu0 0
      %2267 = vmatprep.subr.bf16.mxu0 0
      %2268 = vmatpush2.bf16.msra.mxu0 0
      %2269 = vmatprep.subr.bf16.mxu0 0
      %2270 = vmatpush2.bf16.msra.mxu0 0
      %2271 = vmatprep.mubr.bf16.mxu0 0
      %2272 = vmatmul.mubr.bf16.gmra.mxu0 %v2225
      %v2273 = vpop.f32.mrf.mxu0
      %v2274 = vadd.f32 %v2221, %v2273
      %v2275 = vpop.f32.mrf.mxu0
      %v2276 = vadd.f32 %v2221, %v2275
      %v2277 = vpop.f32.mrf.mxu0
      %v2278 = vpop.f32.mrf.mxu0
      %2279 = vdwg.mxu0
      %2280 = vmatprep.subr.bf16.mxu0 0
      %2281 = vmatpush1.bf16.msra.mxu0 0
      %2282 = vmatprep.subr.bf16.mxu0 0
      %2283 = vmatpush1.bf16.msra.mxu0 0
      %2284 = vmatprep.subr.bf16.mxu0 0
      %2285 = vmatpush1.bf16.msra.mxu0 0
      %2286 = vmatprep.subr.bf16.mxu0 0
      %2287 = vmatpush1.bf16.msra.mxu0 0
      %2288 = vmatprep.subr.bf16.mxu0 0
      %2289 = vmatpush1.bf16.msra.mxu0 0
      %2290 = vmatprep.subr.bf16.mxu0 0
      %2291 = vmatpush1.bf16.msra.mxu0 0
      %2292 = vmatprep.subr.bf16.mxu0 0
      %2293 = vmatpush1.bf16.msra.mxu0 0
      %2294 = vmatprep.subr.bf16.mxu0 %v2237
      %2295 = vmatpush1.bf16.msra.mxu0 %v2234
      %2296 = vmatprep.subr.bf16.mxu0 0
      %2297 = vmatpush2.bf16.msra.mxu0 0
      %2298 = vmatprep.subr.bf16.mxu0 0
      %2299 = vmatpush2.bf16.msra.mxu0 0
      %2300 = vmatprep.subr.bf16.mxu0 0
      %2301 = vmatpush2.bf16.msra.mxu0 0
      %2302 = vmatprep.subr.bf16.mxu0 0
      %2303 = vmatpush2.bf16.msra.mxu0 0
      %2304 = vmatprep.subr.bf16.mxu0 0
      %2305 = vmatpush2.bf16.msra.mxu0 0
      %2306 = vmatprep.subr.bf16.mxu0 0
      %2307 = vmatpush2.bf16.msra.mxu0 0
      %2308 = vmatprep.subr.bf16.mxu0 0
      %2309 = vmatpush2.bf16.msra.mxu0 0
      %2310 = vmatprep.subr.bf16.mxu0 0
      %2311 = vmatpush2.bf16.msra.mxu0 0
      %2312 = vmatprep.mubr.bf16.mxu0 0
      %2313 = vmatmul.mubr.bf16.gmra.mxu0 %v2225
      %v2314 = vpop.f32.mrf.mxu0
      %v2315 = vadd.f32 %v2221, %v2314
      %v2316 = vpop.f32.mrf.mxu0
      %v2317 = vadd.f32 %v2221, %v2316
      %v2318 = vpop.f32.mrf.mxu0
      %v2319 = vpop.f32.mrf.mxu0
      %2320 = vdwg.mxu0
      %v2321 = vmax.f32 %v2274, 0.0
      %v2322 = vmax.f32 %v2276, 0.0
      %v2323 = vmax.f32 %v2315, 0.0
      %v2324 = vmax.f32 %v2317, 0.0
      %v2325 = vpack.c.bf16 %v2321, %v2321
      %v2326 = vpack.c.bf16 %v2322, %v2322
      %v2327 = vpack.c.bf16 %v2323, %v2323
      %v2328 = vpack.c.bf16 %v2324, %v2324
      %v2329 = vld [vmem:[%s13] sm:$0xf]
      %v2330 = vld [vmem:[%s13 + $0x4] sm:$0x1]
      %v2331 = vld [vmem:[%s14] sm:$0xff]
      %v2332 = vld [vmem:[%s14 + $0x8] sm:$0x1]
      %2334 = vset.pattern.permute.xlu0 0
      %2335 = vperm.xlu0 %2334, %v2331
      %v2336 = vpop.permute.xlu0 %2335
      %2339 = vset.pattern.permute.xlu0 0
      %2340 = vperm.xlu0 %2339, %v2332
      %v2341 = vpop.permute.xlu0 %2340
      %v2345 = vunpack.c.l.b16 %v2329
      %v2346 = vunpack.c.l.b16 %v2330
      %v2347 = vpack.c.b16 %v2346, %v2345
      %v2349 = vsel %vm2223, %v2347, 0
      %v2352 = vsel %vm934, %v2325, 0
      %v2355 = vsel %vm934, %v2326, 0
      %v2358 = vsel %vm934, %v2327, 0
      %v2361 = vsel %vm934, %v2328, 0
      %2363 = vmatprep.subr.bf16.mxu0 0
      %2364 = vmatpush1.bf16.msra.mxu0 0
      %2365 = vmatprep.subr.bf16.mxu0 0
      %2366 = vmatpush1.bf16.msra.mxu0 0
      %2367 = vmatprep.subr.bf16.mxu0 0
      %2368 = vmatpush1.bf16.msra.mxu0 0
      %2369 = vmatprep.subr.bf16.mxu0 0
      %2370 = vmatpush1.bf16.msra.mxu0 0
      %2371 = vmatprep.subr.bf16.mxu0 0
      %2372 = vmatpush1.bf16.msra.mxu0 0
      %2373 = vmatprep.subr.bf16.mxu0 0
      %2374 = vmatpush1.bf16.msra.mxu0 0
      %2375 = vmatprep.subr.bf16.mxu0 0
      %2376 = vmatpush1.bf16.msra.mxu0 0
      %2377 = vmatprep.subr.bf16.mxu0 %v2355
      %2378 = vmatpush1.bf16.msra.mxu0 %v2352
      %2379 = vmatprep.subr.bf16.mxu0 0
      %2380 = vmatpush2.bf16.msra.mxu0 0
      %2381 = vmatprep.subr.bf16.mxu0 0
      %2382 = vmatpush2.bf16.msra.mxu0 0
      %2383 = vmatprep.subr.bf16.mxu0 0
      %2384 = vmatpush2.bf16.msra.mxu0 0
      %2385 = vmatprep.subr.bf16.mxu0 0
      %2386 = vmatpush2.bf16.msra.mxu0 0
      %2387 = vmatprep.subr.bf16.mxu0 0
      %2388 = vmatpush2.bf16.msra.mxu0 0
      %2389 = vmatprep.subr.bf16.mxu0 0
      %2390 = vmatpush2.bf16.msra.mxu0 0
      %2391 = vmatprep.subr.bf16.mxu0 0
      %2392 = vmatpush2.bf16.msra.mxu0 0
      %2393 = vmatprep.subr.bf16.mxu0 0
      %2394 = vmatpush2.bf16.msra.mxu0 0
      %2395 = vmatprep.mubr.bf16.mxu0 0
      %2396 = vmatmul.mubr.bf16.gmra.mxu0 %v2349
      %v2397 = vpop.f32.mrf.mxu0
      %v2398 = vadd.f32 %v2336, %v2397
      %v2399 = vpop.f32.mrf.mxu0
      %v2400 = vadd.f32 %v2336, %v2399
      %v2401 = vpop.f32.mrf.mxu0
      %v2402 = vadd.f32 %v2341, %v2401
      %v2403 = vpop.f32.mrf.mxu0
      %v2404 = vadd.f32 %v2341, %v2403
      %2405 = vdwg.mxu0
      %2406 = vmatprep.subr.bf16.mxu0 0
      %2407 = vmatpush1.bf16.msra.mxu0 0
      %2408 = vmatprep.subr.bf16.mxu0 0
      %2409 = vmatpush1.bf16.msra.mxu0 0
      %2410 = vmatprep.subr.bf16.mxu0 0
      %2411 = vmatpush1.bf16.msra.mxu0 0
      %2412 = vmatprep.subr.bf16.mxu0 0
      %2413 = vmatpush1.bf16.msra.mxu0 0
      %2414 = vmatprep.subr.bf16.mxu0 0
      %2415 = vmatpush1.bf16.msra.mxu0 0
      %2416 = vmatprep.subr.bf16.mxu0 0
      %2417 = vmatpush1.bf16.msra.mxu0 0
      %2418 = vmatprep.subr.bf16.mxu0 0
      %2419 = vmatpush1.bf16.msra.mxu0 0
      %2420 = vmatprep.subr.bf16.mxu0 %v2361
      %2421 = vmatpush1.bf16.msra.mxu0 %v2358
      %2422 = vmatprep.subr.bf16.mxu0 0
      %2423 = vmatpush2.bf16.msra.mxu0 0
      %2424 = vmatprep.subr.bf16.mxu0 0
      %2425 = vmatpush2.bf16.msra.mxu0 0
      %2426 = vmatprep.subr.bf16.mxu0 0
      %2427 = vmatpush2.bf16.msra.mxu0 0
      %2428 = vmatprep.subr.bf16.mxu0 0
      %2429 = vmatpush2.bf16.msra.mxu0 0
      %2430 = vmatprep.subr.bf16.mxu0 0
      %2431 = vmatpush2.bf16.msra.mxu0 0
      %2432 = vmatprep.subr.bf16.mxu0 0
      %2433 = vmatpush2.bf16.msra.mxu0 0
      %2434 = vmatprep.subr.bf16.mxu0 0
      %2435 = vmatpush2.bf16.msra.mxu0 0
      %2436 = vmatprep.subr.bf16.mxu0 0
      %2437 = vmatpush2.bf16.msra.mxu0 0
      %2438 = vmatprep.mubr.bf16.mxu0 0
      %2439 = vmatmul.mubr.bf16.gmra.mxu0 %v2349
      %v2440 = vpop.f32.mrf.mxu0
      %v2441 = vadd.f32 %v2336, %v2440
      %v2442 = vpop.f32.mrf.mxu0
      %v2443 = vadd.f32 %v2336, %v2442
      %v2444 = vpop.f32.mrf.mxu0
      %v2445 = vadd.f32 %v2341, %v2444
      %v2446 = vpop.f32.mrf.mxu0
      %v2447 = vadd.f32 %v2341, %v2446
      %2448 = vdwg.mxu0
      %v2449 = vand.u32 2147483647, %v2398
      %v2450 = vand.u32 2147483647, %v2400
      %v2451 = vand.u32 2147483647, %v2441
      %v2452 = vand.u32 2147483647, %v2443
      %v2453 = vand.u32 2147483647, %v2402
      %v2454 = vand.u32 2147483647, %v2404
      %v2455 = vand.u32 2147483647, %v2445
      %v2456 = vand.u32 2147483647, %v2447
      %v2457 = vmax.f32 %v2449, 1e-06
      %v2458 = vmax.f32 %v2450, 1e-06
      %v2459 = vmax.f32 %v2451, 1e-06
      %v2460 = vmax.f32 %v2452, 1e-06
      %v2461 = vmax.f32 %v2453, 1e-06
      %v2462 = vmax.f32 %v2454, 1e-06
      %v2463 = vmax.f32 %v2455, 1e-06
      %v2464 = vmax.f32 %v2456, 1e-06
      %v2465 = vrcp.pop %v2457
      %v2466 = vmul.f32 1.0, %v2465
      %v2467 = vrcp.pop %v2458
      %v2468 = vmul.f32 1.0, %v2467
      %v2469 = vrcp.pop %v2459
      %v2470 = vmul.f32 1.0, %v2469
      %v2471 = vrcp.pop %v2460
      %v2472 = vmul.f32 1.0, %v2471
      %v2473 = vrcp.pop %v2461
      %v2474 = vmul.f32 1.0, %v2473
      %v2475 = vrcp.pop %v2462
      %v2476 = vmul.f32 1.0, %v2475
      %v2477 = vrcp.pop %v2463
      %v2478 = vmul.f32 1.0, %v2477
      %v2479 = vrcp.pop %v2464
      %v2480 = vmul.f32 1.0, %v2479
      %v2481 = vrot.slane %v532, 1
      %v2483 = vadd.f32 %v2481, 0.5
      %v2485 = vlaneseq
      %v2486 = vshrl.u32 %v2485, 7
      %v2487 = vsub.s32 0, %v2486
      %v2488 = vrot.slane %v2483, %v2487
      %v2489 = vlaneseq
      %v2490 = vshrl.u32 %v2489, 7
      %v2491 = vsub.s32 1, %v2490
      %v2492 = vrot.slane %v2483, %v2491
      %v2493 = vlaneseq
      %v2494 = vshrl.u32 %v2493, 7
      %v2495 = vsub.s32 2, %v2494
      %v2496 = vrot.slane %v2483, %v2495
      %v2497 = vlaneseq
      %v2498 = vshrl.u32 %v2497, 7
      %v2499 = vsub.s32 3, %v2498
      %v2500 = vrot.slane %v2483, %v2499
      %v2505 = vsub.f32 %v2488, %v2398
      %v2506 = vsub.f32 %v2492, %v2400
      %v2507 = vsub.f32 %v2496, %v2441
      %v2508 = vsub.f32 %v2500, %v2443
      %v2517 = vrot.slane %v2466, 3
      %v2518 = vrot.slane %v2474, 3
      %v2519 = vsel %vm981, %v2517, %v2518
      %v2520 = vrot.slane %v2468, 3
      %v2521 = vrot.slane %v2476, 3
      %v2522 = vsel %vm981, %v2520, %v2521
      %v2523 = vrot.slane %v2470, 3
      %v2524 = vrot.slane %v2478, 3
      %v2525 = vsel %vm981, %v2523, %v2524
      %v2526 = vrot.slane %v2472, 3
      %v2527 = vrot.slane %v2480, 3
      %v2528 = vsel %vm981, %v2526, %v2527
      %v2533 = vmul.f32 %v2505, %v2519
      %v2534 = vmul.f32 %v2506, %v2522
      %v2535 = vmul.f32 %v2507, %v2525
      %v2536 = vmul.f32 %v2508, %v2528
      %v2537 = vsub.f32 %v2481, 0.5
      %v2539 = vlaneseq
      %v2540 = vshrl.u32 %v2539, 7
      %v2541 = vsub.s32 0, %v2540
      %v2542 = vrot.slane %v2537, %v2541
      %v2543 = vlaneseq
      %v2544 = vshrl.u32 %v2543, 7
      %v2545 = vsub.s32 1, %v2544
      %v2546 = vrot.slane %v2537, %v2545
      %v2547 = vlaneseq
      %v2548 = vshrl.u32 %v2547, 7
      %v2549 = vsub.s32 2, %v2548
      %v2550 = vrot.slane %v2537, %v2549
      %v2551 = vlaneseq
      %v2552 = vshrl.u32 %v2551, 7
      %v2553 = vsub.s32 3, %v2552
      %v2554 = vrot.slane %v2537, %v2553
      %v2559 = vsub.f32 %v2542, %v2398
      %v2560 = vsub.f32 %v2546, %v2400
      %v2561 = vsub.f32 %v2550, %v2441
      %v2562 = vsub.f32 %v2554, %v2443
      %v2563 = vmul.f32 %v2559, %v2519
      %v2564 = vmul.f32 %v2560, %v2522
      %v2565 = vmul.f32 %v2561, %v2525
      %v2566 = vmul.f32 %v2562, %v2528
      %v2571 = vrot.slane %v2533, 3
      %v2572 = vrot.slane %v2534, 3
      %v2573 = vrot.slane %v2535, 3
      %v2574 = vrot.slane %v2536, 3
      %v2579 = vsel %vm905, %v2571, %v2563
      %v2580 = vsel %vm905, %v2572, %v2564
      %v2581 = vsel %vm905, %v2573, %v2565
      %v2582 = vsel %vm905, %v2574, %v2566
      %v2583 = vxor.u32 %v2579, 2147483648
      %v2584 = vxor.u32 %v2580, 2147483648
      %v2585 = vxor.u32 %v2581, 2147483648
      %v2586 = vxor.u32 %v2582, 2147483648
      %v2587 = vmul.f32 %v2583, 1.442695
      %v2588 = vpow.pop %v2587
      %v2589 = vmul.f32 %v2584, 1.442695
      %v2590 = vpow.pop %v2589
      %v2591 = vmul.f32 %v2585, 1.442695
      %v2592 = vpow.pop %v2591
      %v2593 = vmul.f32 %v2586, 1.442695
      %v2594 = vpow.pop %v2593
      %v2595 = vadd.f32 %v2588, 1.0
      %v2596 = vadd.f32 %v2590, 1.0
      %v2597 = vadd.f32 %v2592, 1.0
      %v2598 = vadd.f32 %v2594, 1.0
      %v2599 = vrcp.pop %v2595
      %v2600 = vmul.f32 1.0, %v2599
      %v2601 = vrcp.pop %v2596
      %v2602 = vmul.f32 1.0, %v2601
      %v2603 = vrcp.pop %v2597
      %v2604 = vmul.f32 1.0, %v2603
      %v2605 = vrcp.pop %v2598
      %v2606 = vmul.f32 1.0, %v2605
      %v2611 = vrot.slane %v2600, 3
      %v2612 = vrot.slane %v2602, 3
      %v2613 = vrot.slane %v2604, 3
      %v2614 = vrot.slane %v2606, 3
      %v2619 = vsub.f32 %v2600, %v2611
      %v2620 = vsub.f32 %v2602, %v2612
      %v2621 = vsub.f32 %v2604, %v2613
      %v2622 = vsub.f32 %v2606, %v2614
      %v2627 = vrot.slane %v2398, 1
      %v2628 = vrot.slane %v2400, 1
      %v2629 = vrot.slane %v2441, 1
      %v2630 = vrot.slane %v2443, 1
      %v2635 = vmax.f32 %v2398, %v2627
      %v2636 = vmax.f32 %v2400, %v2628
      %v2637 = vmax.f32 %v2441, %v2629
      %v2638 = vmax.f32 %v2443, %v2630
      %v2639 = vrot.slane %v2398, 2
      %v2640 = vrot.slane %v2400, 2
      %v2641 = vrot.slane %v2441, 2
      %v2642 = vrot.slane %v2443, 2
      %v2647 = vmax.f32 %v2635, %v2639
      %v2648 = vmax.f32 %v2636, %v2640
      %v2649 = vmax.f32 %v2637, %v2641
      %v2650 = vmax.f32 %v2638, %v2642
      %v2651 = vsub.f32 %v2398, %v2647
      %v2652 = vsub.f32 %v2400, %v2648
      %v2653 = vsub.f32 %v2441, %v2649
      %v2654 = vsub.f32 %v2443, %v2650
      %v2655 = vmul.f32 %v2651, 1.442695
      %v2656 = vpow.pop %v2655
      %v2657 = vmul.f32 %v2652, 1.442695
      %v2658 = vpow.pop %v2657
      %v2659 = vmul.f32 %v2653, 1.442695
      %v2660 = vpow.pop %v2659
      %v2661 = vmul.f32 %v2654, 1.442695
      %v2662 = vpow.pop %v2661
      %v2667 = vrot.slane %v2647, 7
      %v2668 = vrot.slane %v2648, 7
      %v2669 = vrot.slane %v2649, 7
      %v2670 = vrot.slane %v2650, 7
      %v2675 = vsub.f32 %v2398, %v2667
      %v2676 = vsub.f32 %v2400, %v2668
      %v2677 = vsub.f32 %v2441, %v2669
      %v2678 = vsub.f32 %v2443, %v2670
      %v2679 = vmul.f32 %v2675, 1.442695
      %v2680 = vpow.pop %v2679
      %v2681 = vmul.f32 %v2676, 1.442695
      %v2682 = vpow.pop %v2681
      %v2683 = vmul.f32 %v2677, 1.442695
      %v2684 = vpow.pop %v2683
      %v2685 = vmul.f32 %v2678, 1.442695
      %v2686 = vpow.pop %v2685
      %v2687 = vrot.slane %v2647, 6
      %v2688 = vrot.slane %v2648, 6
      %v2689 = vrot.slane %v2649, 6
      %v2690 = vrot.slane %v2650, 6
      %v2695 = vsub.f32 %v2398, %v2687
      %v2696 = vsub.f32 %v2400, %v2688
      %v2697 = vsub.f32 %v2441, %v2689
      %v2698 = vsub.f32 %v2443, %v2690
      %v2699 = vmul.f32 %v2695, 1.442695
      %v2700 = vpow.pop %v2699
      %v2701 = vmul.f32 %v2696, 1.442695
      %v2702 = vpow.pop %v2701
      %v2703 = vmul.f32 %v2697, 1.442695
      %v2704 = vpow.pop %v2703
      %v2705 = vmul.f32 %v2698, 1.442695
      %v2706 = vpow.pop %v2705
      %v2707 = vmul.f32 %v2656, %v2619
      %v2708 = vmul.f32 %v2658, %v2620
      %v2709 = vmul.f32 %v2660, %v2621
      %v2710 = vmul.f32 %v2662, %v2622
      %v2715 = vrot.slane %v2680, 1
      %v2716 = vrot.slane %v2682, 1
      %v2717 = vrot.slane %v2684, 1
      %v2718 = vrot.slane %v2686, 1
      %v2723 = vadd.f32 %v2656, %v2715
      %v2724 = vadd.f32 %v2658, %v2716
      %v2725 = vadd.f32 %v2660, %v2717
      %v2726 = vadd.f32 %v2662, %v2718
      %v2727 = vmul.f32 %v2680, %v2619
      %v2728 = vmul.f32 %v2682, %v2620
      %v2729 = vmul.f32 %v2684, %v2621
      %v2730 = vmul.f32 %v2686, %v2622
      %v2735 = vrot.slane %v2727, 1
      %v2736 = vrot.slane %v2728, 1
      %v2737 = vrot.slane %v2729, 1
      %v2738 = vrot.slane %v2730, 1
      %v2743 = vadd.f32 %v2707, %v2735
      %v2744 = vadd.f32 %v2708, %v2736
      %v2745 = vadd.f32 %v2709, %v2737
      %v2746 = vadd.f32 %v2710, %v2738
      %v2751 = vrot.slane %v2700, 2
      %v2752 = vrot.slane %v2702, 2
      %v2753 = vrot.slane %v2704, 2
      %v2754 = vrot.slane %v2706, 2
      %v2759 = vadd.f32 %v2723, %v2751
      %v2760 = vadd.f32 %v2724, %v2752
      %v2761 = vadd.f32 %v2725, %v2753
      %v2762 = vadd.f32 %v2726, %v2754
      %v2763 = vmul.f32 %v2700, %v2619
      %v2764 = vmul.f32 %v2702, %v2620
      %v2765 = vmul.f32 %v2704, %v2621
      %v2766 = vmul.f32 %v2706, %v2622
      %v2771 = vrot.slane %v2763, 2
      %v2772 = vrot.slane %v2764, 2
      %v2773 = vrot.slane %v2765, 2
      %v2774 = vrot.slane %v2766, 2
      %v2779 = vadd.f32 %v2743, %v2771
      %v2780 = vadd.f32 %v2744, %v2772
      %v2781 = vadd.f32 %v2745, %v2773
      %v2782 = vadd.f32 %v2746, %v2774
      %v2783 = vrcp.pop %v2759
      %v2784 = vmul.f32 %v2779, %v2783
      %v2785 = vrcp.pop %v2760
      %v2786 = vmul.f32 %v2780, %v2785
      %v2787 = vrcp.pop %v2761
      %v2788 = vmul.f32 %v2781, %v2787
      %v2789 = vrcp.pop %v2762
      %v2790 = vmul.f32 %v2782, %v2789
      %v2791 = vmax.f32 %v2784, 1e-06
      %v2792 = vmax.f32 %v2786, 1e-06
      %v2793 = vmax.f32 %v2788, 1e-06
      %v2794 = vmax.f32 %v2790, 1e-06
      %v2795 = vlog2.pop %v2791
      %v2796 = vmul.f32 %v2795, 0.6931472
      %v2797 = vlog2.pop %v2792
      %v2798 = vmul.f32 %v2797, 0.6931472
      %v2799 = vlog2.pop %v2793
      %v2800 = vmul.f32 %v2799, 0.6931472
      %v2801 = vlog2.pop %v2794
      %v2802 = vmul.f32 %v2801, 0.6931472
      %v2803 = vrcp.pop 0.6931472
      %v2804 = vmul.f32 %v2796, %v2803
      %v2805 = vmul.f32 %v2798, %v2803
      %v2806 = vmul.f32 %v2800, %v2803
      %v2807 = vmul.f32 %v2802, %v2803
      %v2808 = vsub.f32 0.0, %v2804
      %v2809 = vsub.f32 0.0, %v2805
      %v2810 = vsub.f32 0.0, %v2806
      %v2811 = vsub.f32 0.0, %v2807
      %v2812 = vadd.f32 %v2808, 0.0
      %v2813 = vadd.f32 %v2809, 0.0
      %v2814 = vadd.f32 %v2810, 0.0
      %v2815 = vadd.f32 %v2811, 0.0
      %v2820 = vmul.f32 %v2812, %v1134
      %v2821 = vmul.f32 %v2813, %v1138
      %v2822 = vmul.f32 %v2814, %v1142
      %v2823 = vmul.f32 %v2815, %v1146
      %v2824 = vsel %vm847, %v2820, 0.0
      %v2825 = vsel %vm847, %v2821, 0.0
      %v2826 = vadd.f32 %v2824, %v2825
      %v2827 = vsel %vm847, %v2822, 0.0
      %v2828 = vadd.f32 %v2826, %v2827
      %v2829 = vsel %vm847, %v2823, 0.0
      %v2830 = vadd.f32 %v2828, %v2829
      %2831 = vadd.xlane.f32.xlu0 %v2830
      %v2832 = vpop.xlane.xlu0 %2831
      %2833 = vst [vmem:[%s524] sm:$0x1] %v2832
      %p2834 = scmp.lt.s32.totalorder %s30, 1
      %s2835 = scalar_select %p2834, %s30, 1
      %p2836 = scmp.lt.s32.totalorder %s31, 0
      %s2837 = scalar_select %p2836, %s31, 0
      %s2838 = sadd.s32 %s2837, %s2835
      %s2839 = scalar_lea.vmem %s15, %s2838
      // Predicated region
      $region81: #{hdb_forward.1} parent=79 // pred_check
        %p2840 = pneg %p383
      $region82: #{hdb_forward.1} parent=79 // pred_check_branch
        %2842 = sbr.rel (%p2840) target = $region84
      $region83: #{hdb_forward.1} parent=79 // pred_region
        _
      $region84: #{hdb_forward.1} parent=79 // pred_fallthru
        _
    $region80: #{hdb_forward.1} parent=5 // pred_fallthru
      _
    %p2843 = scmp.le.s32.totalorder 2, %s21
    // Predicated region
    $region85: #{hdb_forward.1} parent=5 // pred_check
      %p2844 = pneg %p2843
    $region86: #{hdb_forward.1} parent=5 // pred_check_branch
      %2846 = sbr.rel (%p2844) target = $region88
    $region87: #{hdb_forward.1} parent=5 // pred_region
      %s2847 = ssub.s32 %s21, 2
      // Predicated region
      $region89: #{hdb_forward.1} parent=87 // pred_check
        %p2848 = pneg %p389
      $region90: #{hdb_forward.1} parent=87 // pred_check_branch
        %2850 = sbr.rel (%p2848) target = $region92
      $region91: #{hdb_forward.1} parent=87 // pred_region
        %p2851 = scmp.lt.s32.totalorder %s32, 1
        %s2852 = scalar_select %p2851, %s32, 1
        %p2853 = scmp.lt.s32.totalorder %s33, 0
        %s2854 = scalar_select %p2853, %s33, 0
        %s2855 = sadd.s32 %s2854, %s2852
        %s2856 = scalar_lea.vmem %s15, %s2855
      $region92: #{hdb_forward.1} parent=87 // pred_fallthru
        _
    $region88: #{hdb_forward.1} parent=5 // pred_fallthru
      _
  $region6: #{hdb_forward.1} parent=0 // loop_footer
    %s25 = sadd.s32 1, %s21
  $region7: #{hdb_forward.1} parent=0 // loop_footer_branch
    %20 = sbr.rel target = $region3
  $region8: #{hdb_forward.1} parent=0 // loop_exit
    _

</llo_original>
